<compile_context>
chip_gen: v7x
topology: tpu7x:2x2x1
jax: 0.10.0
libtpu: 0.0.40
codegen_flags: <defaults>
</compile_context>

<pallas_src>
import functools

import jax
import jax.numpy as jnp
from jax import lax
from jax.experimental import pallas as pl
from jax.experimental.pallas import tpu as pltpu


NEG_INF = -1e30                      # finite "-inf": avoids inf-inf NaNs in-kernel
VMEM_LIMIT = 48 * 1024 * 1024        # <= ~48 MiB per review's v7x guidance


def _sublane_multiple(dtype):
    # bf16/fp16 pack 2 rows per sublane -> minimum useful sublane tile is 16.
    return 16 if jnp.dtype(dtype).itemsize == 2 else 8


def _pick_tile(dim, target, multiple):
    """Largest tile <= target that divides dim and is a multiple of `multiple`.

    Falls back to the full dim (always a legal block size)."""
    if dim <= target:
        return dim
    t = (min(target, dim) // multiple) * multiple
    while t >= multiple:
        if dim % t == 0:
            return t
        t -= multiple
    return dim


# ----------------------------------------------------------------------------
# Tiled linear projection: y = x @ W + b
# ----------------------------------------------------------------------------
def _linear_kernel_f32out(x_ref, w_ref, b_ref, o_ref):
    # o_ref (f32) is resident across the k axis (its index_map ignores k), so
    # accumulate straight into it: no scratch buffer, no finalize copy.
    @pl.when(pl.program_id(2) == 0)
    def _():
        o_ref[...] = jnp.zeros_like(o_ref)

    o_ref[...] += jnp.dot(x_ref[...], w_ref[...],
                          preferred_element_type=jnp.float32)

    @pl.when(pl.program_id(2) == pl.num_programs(2) - 1)
    def _():
        o_ref[...] += b_ref[...].astype(jnp.float32)


def _linear_kernel_lowp(x_ref, w_ref, b_ref, o_ref, acc_ref):
    # Low-precision (bf16) output: keep an f32 VMEM accumulator.
    @pl.when(pl.program_id(2) == 0)
    def _():
        acc_ref[...] = jnp.zeros_like(acc_ref)

    acc_ref[...] += jnp.dot(x_ref[...], w_ref[...],
                            preferred_element_type=jnp.float32)

    @pl.when(pl.program_id(2) == pl.num_programs(2) - 1)
    def _():
        o_ref[...] = (acc_ref[...] + b_ref[...].astype(jnp.float32)
                      ).astype(o_ref.dtype)


def linear(x, w, b, *, out_dtype=None, tm=512, tn=512, tk=512):
    """x: [M, E], w: [E, F], b: [1, F] -> [M, F] (out_dtype)."""
    M, E = x.shape
    F = w.shape[1]
    out_dtype = x.dtype if out_dtype is None else out_dtype
    bm = _pick_tile(M, tm, _sublane_multiple(x.dtype))   # sublane dim
    bn = _pick_tile(F, tn, 128)                          # lane dim
    bk = _pick_tile(E, tk, 128)                          # contraction dim

    common = dict(
        out_shape=jax.ShapeDtypeStruct((M, F), out_dtype),
        grid=(M // bm, F // bn, E // bk),
        in_specs=[
            pl.BlockSpec((bm, bk), lambda i, j, k: (i, k)),
            pl.BlockSpec((bk, bn), lambda i, j, k: (k, j)),
            pl.BlockSpec((1, bn), lambda i, j, k: (0, j)),
        ],
        out_specs=pl.BlockSpec((bm, bn), lambda i, j, k: (i, j)),
        compiler_params=pltpu.CompilerParams(
            dimension_semantics=("parallel", "parallel", "arbitrary"),
            vmem_limit_bytes=VMEM_LIMIT),
    )

    if jnp.dtype(out_dtype) == jnp.dtype(jnp.float32):
        return pl.pallas_call(_linear_kernel_f32out, **common)(x, w, b)
    return pl.pallas_call(
        _linear_kernel_lowp,
        scratch_shapes=[pltpu.VMEM((bm, bn), jnp.float32)],
        **common)(x, w, b)


# ----------------------------------------------------------------------------
# Flash-style attention kernel (online softmax over the key axis)
# ----------------------------------------------------------------------------
def _attn_kernel(q_ref, k_ref, v_ref, mask_ref, o_ref, m_ref, l_ref, acc_ref,
                 *, scale, add_one):
    ki = pl.program_id(3)

    @pl.when(ki == 0)
    def _():
        # add_one variant clamps the running max at 0 (matches the reference
        # softmax-with-+1), otherwise start from a large negative value.
        m_ref[...] = jnp.full_like(m_ref, 0.0 if add_one else NEG_INF)
        l_ref[...] = jnp.zeros_like(l_ref)
        acc_ref[...] = jnp.zeros_like(acc_ref)

    # Scale q once per tile (tq*D work) instead of the (tq,tk) logits every
    # key step; scale in f32, then hand the MXU native (bf16) operands.
    q = (q_ref[...].astype(jnp.float32) * scale).astype(q_ref.dtype)   # (tq, D)
    k = k_ref[...]                                                     # (tk, D)
    v = v_ref[...]                                                     # (tk, D)

    # logits: contract last dims of q and k (no k transpose materialized)
    s = lax.dot_general(q, k, (((1,), (1,)), ((), ())),
                        preferred_element_type=jnp.float32)            # (tq, tk)
    if mask_ref is not None:
        s = s + mask_ref[...]          # additive bias (0 / NEG_INF), (1, tk)

    m_prev = m_ref[...]
    m_new = jnp.maximum(m_prev, jnp.max(s, axis=-1, keepdims=True))
    alpha = jnp.exp(m_prev - m_new)
    p = jnp.exp(s - m_new)             # fp32 softmax math

    l_ref[...] = alpha * l_ref[...] + jnp.sum(p, axis=-1, keepdims=True)
    acc_ref[...] = alpha * acc_ref[...] + lax.dot_general(
        p.astype(v.dtype), v, (((1,), (0,)), ((), ())),
        preferred_element_type=jnp.float32)
    m_ref[...] = m_new

    @pl.when(ki == pl.num_programs(3) - 1)
    def _():
        denom = l_ref[...]
        if add_one:
            denom = denom + jnp.exp(-m_ref[...])   # the "+1" term
        o_ref[...] = (acc_ref[...] * pl.reciprocal(denom, approx=False)
                      ).astype(o_ref.dtype)


def _attn_kernel_nomask(q_ref, k_ref, v_ref, o_ref, m_ref, l_ref, acc_ref,
                        *, scale, add_one):
    _attn_kernel(q_ref, k_ref, v_ref, None, o_ref, m_ref, l_ref, acc_ref,
                 scale=scale, add_one=add_one)


def attention(xq, xkv, mask_bias, *, num_heads, scale, add_one,
              tq_target=512, tk_target=512):
    """xq: [B, Nq, E]; xkv: [B, Nk, 2E] (K columns then V columns);
    mask_bias: [B, 1, Nk] additive bias or None -> [B, Nq, E]."""
    B, Nq, E = xq.shape
    _, Nk, E2 = xkv.shape
    assert E2 == 2 * E
    H = num_heads
    D = E // H
    if D % 128 != 0:
        # TODO(synk): head dims that are not a multiple of 128 need head-grouped
        # blocks (process 128//D heads per grid step with a batched contraction).
        raise NotImplementedError("head_dim must be a multiple of 128")

    tq = _pick_tile(Nq, tq_target, _sublane_multiple(xq.dtype))
    tk = _pick_tile(Nk, tk_target, 128)
    grid = (B, H, Nq // tq, Nk // tk)

    # Head selection (and K vs V selection inside xkv) is pure DMA addressing.
    q_spec = pl.BlockSpec((None, tq, D), lambda b, h, qi, ki: (b, qi, h))
    k_spec = pl.BlockSpec((None, tk, D), lambda b, h, qi, ki: (b, ki, h))
    v_spec = pl.BlockSpec((None, tk, D), lambda b, h, qi, ki: (b, ki, h + H))
    o_spec = pl.BlockSpec((None, tq, D), lambda b, h, qi, ki: (b, qi, h))

    if mask_bias is not None:
        kernel = functools.partial(_attn_kernel, scale=scale, add_one=add_one)
        in_specs = [q_spec, k_spec, v_spec,
                    pl.BlockSpec((None, 1, tk), lambda b, h, qi, ki: (b, 0, ki))]
        args = (xq, xkv, xkv, mask_bias)
    else:
        kernel = functools.partial(_attn_kernel_nomask, scale=scale,
                                   add_one=add_one)
        in_specs = [q_spec, k_spec, v_spec]
        args = (xq, xkv, xkv)

    return pl.pallas_call(
        kernel,
        out_shape=jax.ShapeDtypeStruct((B, Nq, E), xq.dtype),
        grid=grid,
        in_specs=in_specs,
        out_specs=o_spec,
        scratch_shapes=[
            pltpu.VMEM((tq, 1), jnp.float32),   # running max m
            pltpu.VMEM((tq, 1), jnp.float32),   # running denom l
            pltpu.VMEM((tq, D), jnp.float32),   # output accumulator
        ],
        compiler_params=pltpu.CompilerParams(
            dimension_semantics=("parallel", "parallel", "parallel",
                                 "arbitrary"),
            vmem_limit_bytes=VMEM_LIMIT),
    )(*args)


# ----------------------------------------------------------------------------
# Module wrapper
# ----------------------------------------------------------------------------
class MultiHeadAttentionPallas:
    def __init__(self, embed_dim, num_heads, add_one_to_softmax=False,
                 compute_dtype=jnp.bfloat16, key=None):
        assert embed_dim % num_heads == 0
        self.embed_dim = embed_dim
        self.num_heads = num_heads
        self.head_dim = embed_dim // num_heads
        self.scale = float(embed_dim) ** (-0.5)   # matches the PyTorch module
        self.add_one_to_softmax = add_one_to_softmax
        self.compute_dtype = compute_dtype

        keys = jax.random.split(key, 6)
        init_w = lambda k, shp: (0.02 * jax.random.normal(k, shp)
                                 ).astype(compute_dtype)       # bf16 MXU operands
        init_b = lambda k, shp: (0.02 * jax.random.normal(k, shp)
                                 ).astype(jnp.float32)          # biases stay f32
        # stored as [in, out] so the kernels compute x @ W + b
        self.wq = init_w(keys[0], (embed_dim, embed_dim))
        self.bq = init_b(keys[1], (1, embed_dim))
        self.wkv = init_w(keys[2], (embed_dim, 2 * embed_dim))
        self.bkv = init_b(keys[3], (1, 2 * embed_dim))
        self.wo = init_w(keys[4], (embed_dim, embed_dim))
        self.bo = init_b(keys[5], (1, embed_dim))

    def __call__(self, q, kv, mask=None):
        B, Nq, E = q.shape
        _, Nkv, _ = kv.shape
        cd = self.compute_dtype
        out_dtype = q.dtype

        # Projections: bf16 activations/weights in, bf16 activations out
        # (halves the HBM traffic of the intermediates); f32 accumulation.
        xq = linear(q.reshape(B * Nq, E).astype(cd), self.wq, self.bq,
                    out_dtype=cd).reshape(B, Nq, E)
        # Fused K/V projection; K and V head slices are picked straight out of
        # the [B, Nkv, 2E] result by the attention BlockSpecs.
        xkv = linear(kv.reshape(B * Nkv, E).astype(cd), self.wkv, self.bkv,
                     out_dtype=cd).reshape(B, Nkv, 2 * E)

        if mask is None:
            mask_bias = None          # mask path removed entirely at trace time
        else:
            assert mask.ndim == 2
            mask_bias = jnp.where(mask > 0, 0.0, NEG_INF).astype(jnp.float32)
            mask_bias = mask_bias.reshape(B, 1, Nkv)

        attn = attention(xq, xkv, mask_bias, num_heads=self.num_heads,
                         scale=self.scale, add_one=self.add_one_to_softmax)

        # Final projection back to the caller's dtype (f32): direct f32
        # accumulation into the output block (no scratch).
        out = linear(attn.reshape(B * Nq, E), self.wo, self.bo,
                     out_dtype=out_dtype).reshape(B, Nq, E)
        return out


# ----------------------------------------------------------------------------
# Pure-JAX reference (mirrors the PyTorch code + the kernel's bf16 casts)
# ----------------------------------------------------------------------------
def reference_forward(m, q, kv, mask=None):
    B, Nq, E = q.shape
    _, Nkv, _ = kv.shape
    H, D = m.num_heads, m.head_dim
    cd = m.compute_dtype

    def mm(a, b):   # bf16 operands, f32 accumulate (same as the kernels)
        return jnp.einsum("...ij,jk->...ik", a.astype(cd), b.astype(cd),
                          preferred_element_type=jnp.float32)

    xq = (mm(q, m.wq) + m.bq).astype(cd)
    xkv = (mm(kv, m.wkv) + m.bkv).astype(cd)
    xk, xv = xkv[..., :E], xkv[..., E:]
    to_heads = lambda x, N: x.reshape(B, N, H, D).transpose(0, 2, 1, 3)
    qh, kh, vh = to_heads(xq, Nq), to_heads(xk, Nkv), to_heads(xv, Nkv)
    qh = (qh.astype(jnp.float32) * m.scale).astype(cd)
    logits = jnp.einsum("bhqd,bhkd->bhqk", qh, kh,
                        preferred_element_type=jnp.float32)
    if mask is not None:
        bias = jnp.where(mask > 0, 0.0, NEG_INF).astype(jnp.float32)
        logits = logits + bias[:, None, None, :]
    if m.add_one_to_softmax:
        mx = jnp.maximum(jnp.max(logits, axis=-1, keepdims=True), 0.0)
        un = jnp.exp(logits - mx)
        p = un / (jnp.sum(un, axis=-1, keepdims=True) + jnp.exp(-mx))
    else:
        p = jax.nn.softmax(logits, axis=-1)
    attn = jnp.einsum("bhqk,bhkd->bhqd", p.astype(cd), vh,
                      preferred_element_type=jnp.float32).astype(cd)
    attn = attn.transpose(0, 2, 1, 3).reshape(B, Nq, E)
    out = mm(attn, m.wo) + m.bo
    return out


if __name__ == "__main__":
    # head_dim = 128 -> lane-dense per-head blocks; Nkv=1024 exercises the
    # online-softmax accumulation over multiple key tiles.
    B, Nq, Nkv, E, H = 2, 256, 1024, 256, 2
    key = jax.random.PRNGKey(0)
    kq, kkv, kparams = jax.random.split(key, 3)

    q = jax.random.normal(kq, (B, Nq, E), dtype=jnp.float32)
    kv = jax.random.normal(kkv, (B, Nkv, E), dtype=jnp.float32)
    # mask: 1 = attend, 0 = masked out (no fully-masked row)
    mask = jnp.ones((B, Nkv), dtype=jnp.int32).at[1, -128:].set(0)

    ok = True
    for add_one in (False, True):
        mha = MultiHeadAttentionPallas(E, H, add_one_to_softmax=add_one,
                                       key=kparams)
        for msk in (mask, None):
            out = jax.block_until_ready(mha(q, kv, msk))
            ref = jax.block_until_ready(reference_forward(mha, q, kv, msk))
            err = float(jnp.max(jnp.abs(out - ref)))
            if not (out.shape == (B, Nq, E) and err < 1e-2):
                ok = False
                print(f"mismatch (add_one={add_one}, "
                      f"mask={'yes' if msk is not None else 'no'}): "
                      f"max abs err = {err}")

    if ok:
        print("KERNEL_OK")
</pallas_src>

<mosaic_0001>
module attributes {stable_mosaic.version = 11 : i64} {
  func.func @_linear_kernel_lowp(%arg0: i32, %arg1: i32, %arg2: i32, %arg3: memref<512x256xbf16, #tpu.memory_space<vmem>>, %arg4: memref<256x256xbf16, #tpu.memory_space<vmem>>, %arg5: memref<1x256xf32, #tpu.memory_space<vmem>>, %arg6: memref<512x256xbf16, #tpu.memory_space<vmem>>, %arg7: memref<512x256xf32, #tpu.memory_space<vmem>>) attributes {dimension_semantics = [#tpu.dimension_semantics<parallel>, #tpu.dimension_semantics<parallel>, #tpu.dimension_semantics<arbitrary>], iteration_bounds = array<i64: 1, 1, 1>, scalar_prefetch = 0 : i64, scratch_operands = 1 : i64, tpu.core_type = #tpu.core_type<tc>, window_params = [{transform_indices = @transform_0, window_bounds = array<i64: 512, 256>}, {transform_indices = @transform_1, window_bounds = array<i64: 256, 256>}, {transform_indices = @transform_2, window_bounds = array<i64: 1, 256>}, {transform_indices = @transform_3, window_bounds = array<i64: 512, 256>}]} {
    %c0_i32 = arith.constant 0 : i32
    %0 = arith.cmpi eq, %arg2, %c0_i32 : i32
    %1 = arith.extui %0 : i1 to i32
    %c0_i32_0 = arith.constant 0 : i32
    %2 = arith.cmpi ne, %1, %c0_i32_0 : i32
    scf.if %2 {
      %cst_10 = arith.constant 0.000000e+00 : f32
      %12 = vector.broadcast %cst_10 : f32 to vector<512x256xf32>
      %c0_11 = arith.constant 0 : index
      %c0_12 = arith.constant 0 : index
      %13 = vector.load %arg7[%c0_11, %c0_12] : memref<512x256xf32, #tpu.memory_space<vmem>>, vector<512x256xf32>
      tpu.vector_store %arg7[%c0_11, %c0_12], %12 {strides = array<i32>} : memref<512x256xf32, #tpu.memory_space<vmem>>, vector<512x256xf32>,
    } else {
    }
    %c0 = arith.constant 0 : index
    %c0_1 = arith.constant 0 : index
    %3 = vector.load %arg7[%c0, %c0_1] : memref<512x256xf32, #tpu.memory_space<vmem>>, vector<512x256xf32>
    %c0_2 = arith.constant 0 : index
    %c0_3 = arith.constant 0 : index
    %4 = vector.load %arg3[%c0_2, %c0_3] : memref<512x256xbf16, #tpu.memory_space<vmem>>, vector<512x256xbf16>
    %c0_4 = arith.constant 0 : index
    %c0_5 = arith.constant 0 : index
    %5 = vector.load %arg4[%c0_4, %c0_5] : memref<256x256xbf16, #tpu.memory_space<vmem>>, vector<256x256xbf16>
    %cst = arith.constant dense<0.000000e+00> : vector<512x256xf32>
    %6 = tpu.matmul %4, %5, %cst {dimension_numbers = #tpu.dot_dimension_numbers<[1], [0], [0], [1], [0, 0, 1, 1], [], []>} : vector<512x256xbf16>, vector<256x256xbf16>, vector<512x256xf32> -> vector<512x256xf32>
    %7 = arith.addf %3, %6 : vector<512x256xf32>
    %c0_6 = arith.constant 0 : index
    %c0_7 = arith.constant 0 : index
    %8 = vector.load %arg7[%c0_6, %c0_7] : memref<512x256xf32, #tpu.memory_space<vmem>>, vector<512x256xf32>
    tpu.vector_store %arg7[%c0_6, %c0_7], %7 {strides = array<i32>} : memref<512x256xf32, #tpu.memory_space<vmem>>, vector<512x256xf32>,
    %c0_i32_8 = arith.constant 0 : i32
    %9 = arith.cmpi eq, %arg2, %c0_i32_8 : i32
    %10 = arith.extui %9 : i1 to i32
    %c0_i32_9 = arith.constant 0 : i32
    %11 = arith.cmpi ne, %10, %c0_i32_9 : i32
    scf.if %11 {
      %c0_10 = arith.constant 0 : index
      %c0_11 = arith.constant 0 : index
      %12 = vector.load %arg7[%c0_10, %c0_11] : memref<512x256xf32, #tpu.memory_space<vmem>>, vector<512x256xf32>
      %c0_12 = arith.constant 0 : index
      %c0_13 = arith.constant 0 : index
      %13 = vector.load %arg5[%c0_12, %c0_13] : memref<1x256xf32, #tpu.memory_space<vmem>>, vector<1x256xf32>
      %14 = vector.broadcast %13 : vector<1x256xf32> to vector<512x256xf32>
      %15 = arith.addf %12, %14 : vector<512x256xf32>
      %16 = arith.truncf %15 : vector<512x256xf32> to vector<512x256xbf16>
      %c0_14 = arith.constant 0 : index
      %c0_15 = arith.constant 0 : index
      %17 = vector.load %arg6[%c0_14, %c0_15] : memref<512x256xbf16, #tpu.memory_space<vmem>>, vector<512x256xbf16>
      tpu.vector_store %arg6[%c0_14, %c0_15], %16 {strides = array<i32>} : memref<512x256xbf16, #tpu.memory_space<vmem>>, vector<512x256xbf16>,
    } else {
    }
    return
  }
  func.func @transform_0(%arg0: i32, %arg1: i32, %arg2: i32) -> (i32, i32) {
    %c0_i32 = arith.constant 0 : i32
    return %arg0, %arg2 : i32, i32
  }
  func.func @transform_1(%arg0: i32, %arg1: i32, %arg2: i32) -> (i32, i32) {
    %c0_i32 = arith.constant 0 : i32
    return %arg2, %arg1 : i32, i32
  }
  func.func @transform_2(%arg0: i32, %arg1: i32, %arg2: i32) -> (i32, i32) {
    %c0_i32 = arith.constant 0 : i32
    %c0_i32_0 = arith.constant 0 : i32
    return %c0_i32, %arg1 : i32, i32
  }
  func.func @transform_3(%arg0: i32, %arg1: i32, %arg2: i32) -> (i32, i32) {
    %c0_i32 = arith.constant 0 : i32
    return %arg0, %arg1 : i32, i32
  }
}

</mosaic_0001>

<llo_original>
// kernel: tpu_custom_call.1
$region0: #{tpu_custom_call.1}
  #allocation0 [shape = 'u32[]', space=smem, size = 0x4, offset = 0x4, fixed_abs, tag = 'smem constant byte address 0x4 - core index']
  #allocation1 [shape = 'u32[144,128]{1,0:T(1,128)}', space=vmem, size = 0x12000, scoped, tag = 'internal scratch']
  #allocation2 [shape = 'f32[512,256]{1,0:T(8,128)}', space=vmem, size = 0x80000, scoped, tag = 'scratch operand']
  %s0 = inlined_call_operand.hbm [shape: bf16[512,256], index: 0, kind: input, shape index: {}]
  %s1 = inlined_call_operand.hbm [shape: bf16[256,256], index: 1, kind: input, shape index: {}]
  %s2 = inlined_call_operand.vmem [shape: f32[1,256], index: 2, kind: input, shape index: {}]
  %s3 = inlined_call_operand.hbm [shape: bf16[512,256], index: 3, kind: output, shape index: {}]
  %s4 = sld [smem:[#allocation0]]
  $region38: #{tpu_custom_call.1} parent=0
    _
  %s6 = ssub.s32 1, %s4
  %s7 = scalar_select 0, %s6, %s4
  $region1: #{tpu_custom_call.1} parent=0
    #allocation3 [shape = 'u8[262144]{0}', space=vmem, size = 0x40000, scoped, tag = 'input window, operand 0, single buffered']
    #allocation4 [shape = 's32[1]{0}', space=sflag, size = 0x4, scoped, tag = 'scoped memory for tpu_custom_call.1']
    #allocation5 [shape = 's32[1]{0}', space=sflag, size = 0x4, scoped, tag = 'scoped memory for tpu_custom_call.1']
    #allocation6 [shape = 'u8[131072]{0}', space=vmem, size = 0x20000, scoped, tag = 'input window, operand 1, single buffered']
    #allocation7 [shape = 's32[1]{0}', space=sflag, size = 0x4, scoped, tag = 'scoped memory for tpu_custom_call.1']
    #allocation8 [shape = 'u8[262144]{0}', space=vmem, size = 0x40000, scoped, tag = 'output window, operand 0, single buffered']
    %8 = vsyncpa [#allocation4], 0
    %9 = vsyncpa [#allocation7], 0
    %10 = vsyncpa [#allocation5], 0
    // Predicated region
    $region2: #{tpu_custom_call.1} parent=1 // pred_check
      _
    $region3: #{tpu_custom_call.1} parent=1 // pred_check_branch
      %12 = sbr.rel (0) target = $region5
    $region4: #{tpu_custom_call.1} parent=1 // pred_region
      %s14 = ssub.s32 8192, 8192
      %15 = vsyncadd [#allocation4], %s14
      %s16 = sshll.u32 [#allocation3], 4
      %s17 = int_to_ptr.vmem [resolvable:$true] %s16
      %22 = dma.hbm_to_vmem [thread:$0]  %s0, 8192, %s17, [#allocation4], 128, 128, 8
    $region5: #{tpu_custom_call.1} parent=1 // pred_fallthru
      _
    // Predicated region
    $region6: #{tpu_custom_call.1} parent=1 // pred_check
      _
    $region7: #{tpu_custom_call.1} parent=1 // pred_check_branch
      %24 = sbr.rel (0) target = $region9
    $region8: #{tpu_custom_call.1} parent=1 // pred_region
      %s26 = ssub.s32 4096, 4096
      %27 = vsyncadd [#allocation7], %s26
      %s28 = sshll.u32 [#allocation6], 4
      %s29 = int_to_ptr.vmem [resolvable:$true] %s28
      %34 = dma.hbm_to_vmem [thread:$0]  %s1, 4096, %s29, [#allocation7], 128, 128, 8
    $region9: #{tpu_custom_call.1} parent=1 // pred_fallthru
      _
    // Predicated region
    $region10: #{tpu_custom_call.1} parent=1 // pred_check
      _
    $region11: #{tpu_custom_call.1} parent=1 // pred_check_branch
      %36 = sbr.rel (0) target = $region13
    $region12: #{tpu_custom_call.1} parent=1 // pred_region
      _
    $region13: #{tpu_custom_call.1} parent=1 // pred_fallthru
      _
    // Predicated region
    $region14: #{tpu_custom_call.1} parent=1 // pred_check
      _
    $region15: #{tpu_custom_call.1} parent=1 // pred_check_branch
      %38 = sbr.rel (0) target = $region17
    $region16: #{tpu_custom_call.1} parent=1 // pred_region
      %39 = dma.done [#allocation4], 8192
    $region17: #{tpu_custom_call.1} parent=1 // pred_fallthru
      _
    // Predicated region
    $region18: #{tpu_custom_call.1} parent=1 // pred_check
      _
    $region19: #{tpu_custom_call.1} parent=1 // pred_check_branch
      %41 = sbr.rel (0) target = $region21
    $region20: #{tpu_custom_call.1} parent=1 // pred_region
      %42 = dma.done [#allocation7], 4096
    $region21: #{tpu_custom_call.1} parent=1 // pred_fallthru
      _
    %p43 = scmp.eq.s32.totalorder 0, 0
    // Predicated region
    $region22: #{tpu_custom_call.1} parent=1 // pred_check
      %p44 = pneg %p43
    $region23: #{tpu_custom_call.1} parent=1 // pred_check_branch
      %46 = sbr.rel (%p44) target = $region25
    $region24: #{tpu_custom_call.1} parent=1 // pred_region
      %47 = vst [vmem:[#allocation2] sm:$0xff] 0.0
      %48 = vst [vmem:[#allocation2 + $0x8] sm:$0xff] 0.0
      %49 = vst [vmem:[#allocation2 + $0x10] sm:$0xff] 0.0
      %50 = vst [vmem:[#allocation2 + $0x18] sm:$0xff] 0.0
      %51 = vst [vmem:[#allocation2 + $0x20] sm:$0xff] 0.0
      %52 = vst [vmem:[#allocation2 + $0x28] sm:$0xff] 0.0
      %53 = vst [vmem:[#allocation2 + $0x30] sm:$0xff] 0.0
      %54 = vst [vmem:[#allocation2 + $0x38] sm:$0xff] 0.0
      %55 = vst [vmem:[#allocation2 + $0x40] sm:$0xff] 0.0
      %56 = vst [vmem:[#allocation2 + $0x48] sm:$0xff] 0.0
      %57 = vst [vmem:[#allocation2 + $0x50] sm:$0xff] 0.0
      %58 = vst [vmem:[#allocation2 + $0x58] sm:$0xff] 0.0
      %59 = vst [vmem:[#allocation2 + $0x60] sm:$0xff] 0.0
      %60 = vst [vmem:[#allocation2 + $0x68] sm:$0xff] 0.0
      %61 = vst [vmem:[#allocation2 + $0x70] sm:$0xff] 0.0
      %62 = vst [vmem:[#allocation2 + $0x78] sm:$0xff] 0.0
      %63 = vst [vmem:[#allocation2 + $0x80] sm:$0xff] 0.0
      %64 = vst [vmem:[#allocation2 + $0x88] sm:$0xff] 0.0
      %65 = vst [vmem:[#allocation2 + $0x90] sm:$0xff] 0.0
      %66 = vst [vmem:[#allocation2 + $0x98] sm:$0xff] 0.0
      %67 = vst [vmem:[#allocation2 + $0xa0] sm:$0xff] 0.0
      %68 = vst [vmem:[#allocation2 + $0xa8] sm:$0xff] 0.0
      %69 = vst [vmem:[#allocation2 + $0xb0] sm:$0xff] 0.0
      %70 = vst [vmem:[#allocation2 + $0xb8] sm:$0xff] 0.0
      %71 = vst [vmem:[#allocation2 + $0xc0] sm:$0xff] 0.0
      %72 = vst [vmem:[#allocation2 + $0xc8] sm:$0xff] 0.0
      %73 = vst [vmem:[#allocation2 + $0xd0] sm:$0xff] 0.0
      %74 = vst [vmem:[#allocation2 + $0xd8] sm:$0xff] 0.0
      %75 = vst [vmem:[#allocation2 + $0xe0] sm:$0xff] 0.0
      %76 = vst [vmem:[#allocation2 + $0xe8] sm:$0xff] 0.0
      %77 = vst [vmem:[#allocation2 + $0xf0] sm:$0xff] 0.0
      %78 = vst [vmem:[#allocation2 + $0xf8] sm:$0xff] 0.0
      %79 = vst [vmem:[#allocation2 + $0x100] sm:$0xff] 0.0
      %80 = vst [vmem:[#allocation2 + $0x108] sm:$0xff] 0.0
      %81 = vst [vmem:[#allocation2 + $0x110] sm:$0xff] 0.0
      %82 = vst [vmem:[#allocation2 + $0x118] sm:$0xff] 0.0
      %83 = vst [vmem:[#allocation2 + $0x120] sm:$0xff] 0.0
      %84 = vst [vmem:[#allocation2 + $0x128] sm:$0xff] 0.0
      %85 = vst [vmem:[#allocation2 + $0x130] sm:$0xff] 0.0
      %86 = vst [vmem:[#allocation2 + $0x138] sm:$0xff] 0.0
      %87 = vst [vmem:[#allocation2 + $0x140] sm:$0xff] 0.0
      %88 = vst [vmem:[#allocation2 + $0x148] sm:$0xff] 0.0
      %89 = vst [vmem:[#allocation2 + $0x150] sm:$0xff] 0.0
      %90 = vst [vmem:[#allocation2 + $0x158] sm:$0xff] 0.0
      %91 = vst [vmem:[#allocation2 + $0x160] sm:$0xff] 0.0
      %92 = vst [vmem:[#allocation2 + $0x168] sm:$0xff] 0.0
      %93 = vst [vmem:[#allocation2 + $0x170] sm:$0xff] 0.0
      %94 = vst [vmem:[#allocation2 + $0x178] sm:$0xff] 0.0
      %95 = vst [vmem:[#allocation2 + $0x180] sm:$0xff] 0.0
      %96 = vst [vmem:[#allocation2 + $0x188] sm:$0xff] 0.0
      %97 = vst [vmem:[#allocation2 + $0x190] sm:$0xff] 0.0
      %98 = vst [vmem:[#allocation2 + $0x198] sm:$0xff] 0.0
      %99 = vst [vmem:[#allocation2 + $0x1a0] sm:$0xff] 0.0
      %100 = vst [vmem:[#allocation2 + $0x1a8] sm:$0xff] 0.0
      %101 = vst [vmem:[#allocation2 + $0x1b0] sm:$0xff] 0.0
      %102 = vst [vmem:[#allocation2 + $0x1b8] sm:$0xff] 0.0
      %103 = vst [vmem:[#allocation2 + $0x1c0] sm:$0xff] 0.0
      %104 = vst [vmem:[#allocation2 + $0x1c8] sm:$0xff] 0.0
      %105 = vst [vmem:[#allocation2 + $0x1d0] sm:$0xff] 0.0
      %106 = vst [vmem:[#allocation2 + $0x1d8] sm:$0xff] 0.0
      %107 = vst [vmem:[#allocation2 + $0x1e0] sm:$0xff] 0.0
      %108 = vst [vmem:[#allocation2 + $0x1e8] sm:$0xff] 0.0
      %109 = vst [vmem:[#allocation2 + $0x1f0] sm:$0xff] 0.0
      %110 = vst [vmem:[#allocation2 + $0x1f8] sm:$0xff] 0.0
      %111 = vst [vmem:[#allocation2 + $0x200] sm:$0xff] 0.0
      %112 = vst [vmem:[#allocation2 + $0x208] sm:$0xff] 0.0
      %113 = vst [vmem:[#allocation2 + $0x210] sm:$0xff] 0.0
      %114 = vst [vmem:[#allocation2 + $0x218] sm:$0xff] 0.0
      %115 = vst [vmem:[#allocation2 + $0x220] sm:$0xff] 0.0
      %116 = vst [vmem:[#allocation2 + $0x228] sm:$0xff] 0.0
      %117 = vst [vmem:[#allocation2 + $0x230] sm:$0xff] 0.0
      %118 = vst [vmem:[#allocation2 + $0x238] sm:$0xff] 0.0
      %119 = vst [vmem:[#allocation2 + $0x240] sm:$0xff] 0.0
      %120 = vst [vmem:[#allocation2 + $0x248] sm:$0xff] 0.0
      %121 = vst [vmem:[#allocation2 + $0x250] sm:$0xff] 0.0
      %122 = vst [vmem:[#allocation2 + $0x258] sm:$0xff] 0.0
      %123 = vst [vmem:[#allocation2 + $0x260] sm:$0xff] 0.0
      %124 = vst [vmem:[#allocation2 + $0x268] sm:$0xff] 0.0
      %125 = vst [vmem:[#allocation2 + $0x270] sm:$0xff] 0.0
      %126 = vst [vmem:[#allocation2 + $0x278] sm:$0xff] 0.0
      %127 = vst [vmem:[#allocation2 + $0x280] sm:$0xff] 0.0
      %128 = vst [vmem:[#allocation2 + $0x288] sm:$0xff] 0.0
      %129 = vst [vmem:[#allocation2 + $0x290] sm:$0xff] 0.0
      %130 = vst [vmem:[#allocation2 + $0x298] sm:$0xff] 0.0
      %131 = vst [vmem:[#allocation2 + $0x2a0] sm:$0xff] 0.0
      %132 = vst [vmem:[#allocation2 + $0x2a8] sm:$0xff] 0.0
      %133 = vst [vmem:[#allocation2 + $0x2b0] sm:$0xff] 0.0
      %134 = vst [vmem:[#allocation2 + $0x2b8] sm:$0xff] 0.0
      %135 = vst [vmem:[#allocation2 + $0x2c0] sm:$0xff] 0.0
      %136 = vst [vmem:[#allocation2 + $0x2c8] sm:$0xff] 0.0
      %137 = vst [vmem:[#allocation2 + $0x2d0] sm:$0xff] 0.0
      %138 = vst [vmem:[#allocation2 + $0x2d8] sm:$0xff] 0.0
      %139 = vst [vmem:[#allocation2 + $0x2e0] sm:$0xff] 0.0
      %140 = vst [vmem:[#allocation2 + $0x2e8] sm:$0xff] 0.0
      %141 = vst [vmem:[#allocation2 + $0x2f0] sm:$0xff] 0.0
      %142 = vst [vmem:[#allocation2 + $0x2f8] sm:$0xff] 0.0
      %143 = vst [vmem:[#allocation2 + $0x300] sm:$0xff] 0.0
      %144 = vst [vmem:[#allocation2 + $0x308] sm:$0xff] 0.0
      %145 = vst [vmem:[#allocation2 + $0x310] sm:$0xff] 0.0
      %146 = vst [vmem:[#allocation2 + $0x318] sm:$0xff] 0.0
      %147 = vst [vmem:[#allocation2 + $0x320] sm:$0xff] 0.0
      %148 = vst [vmem:[#allocation2 + $0x328] sm:$0xff] 0.0
      %149 = vst [vmem:[#allocation2 + $0x330] sm:$0xff] 0.0
      %150 = vst [vmem:[#allocation2 + $0x338] sm:$0xff] 0.0
      %151 = vst [vmem:[#allocation2 + $0x340] sm:$0xff] 0.0
      %152 = vst [vmem:[#allocation2 + $0x348] sm:$0xff] 0.0
      %153 = vst [vmem:[#allocation2 + $0x350] sm:$0xff] 0.0
      %154 = vst [vmem:[#allocation2 + $0x358] sm:$0xff] 0.0
      %155 = vst [vmem:[#allocation2 + $0x360] sm:$0xff] 0.0
      %156 = vst [vmem:[#allocation2 + $0x368] sm:$0xff] 0.0
      %157 = vst [vmem:[#allocation2 + $0x370] sm:$0xff] 0.0
      %158 = vst [vmem:[#allocation2 + $0x378] sm:$0xff] 0.0
      %159 = vst [vmem:[#allocation2 + $0x380] sm:$0xff] 0.0
      %160 = vst [vmem:[#allocation2 + $0x388] sm:$0xff] 0.0
      %161 = vst [vmem:[#allocation2 + $0x390] sm:$0xff] 0.0
      %162 = vst [vmem:[#allocation2 + $0x398] sm:$0xff] 0.0
      %163 = vst [vmem:[#allocation2 + $0x3a0] sm:$0xff] 0.0
      %164 = vst [vmem:[#allocation2 + $0x3a8] sm:$0xff] 0.0
      %165 = vst [vmem:[#allocation2 + $0x3b0] sm:$0xff] 0.0
      %166 = vst [vmem:[#allocation2 + $0x3b8] sm:$0xff] 0.0
      %167 = vst [vmem:[#allocation2 + $0x3c0] sm:$0xff] 0.0
      %168 = vst [vmem:[#allocation2 + $0x3c8] sm:$0xff] 0.0
      %169 = vst [vmem:[#allocation2 + $0x3d0] sm:$0xff] 0.0
      %170 = vst [vmem:[#allocation2 + $0x3d8] sm:$0xff] 0.0
      %171 = vst [vmem:[#allocation2 + $0x3e0] sm:$0xff] 0.0
      %172 = vst [vmem:[#allocation2 + $0x3e8] sm:$0xff] 0.0
      %173 = vst [vmem:[#allocation2 + $0x3f0] sm:$0xff] 0.0
      %174 = vst [vmem:[#allocation2 + $0x3f8] sm:$0xff] 0.0
    $region25: #{tpu_custom_call.1} parent=1 // pred_fallthru
      _
    %v175 = vld [vmem:[#allocation2] sm:$0xff]
    %v176 = vld [vmem:[#allocation2 + $0x8] sm:$0xff]
    %v177 = vld [vmem:[#allocation2 + $0x10] sm:$0xff]
    %v178 = vld [vmem:[#allocation2 + $0x18] sm:$0xff]
    %v179 = vld [vmem:[#allocation2 + $0x20] sm:$0xff]
    %v180 = vld [vmem:[#allocation2 + $0x28] sm:$0xff]
    %v181 = vld [vmem:[#allocation2 + $0x30] sm:$0xff]
    %v182 = vld [vmem:[#allocation2 + $0x38] sm:$0xff]
    %v183 = vld [vmem:[#allocation2 + $0x40] sm:$0xff]
    %v184 = vld [vmem:[#allocation2 + $0x48] sm:$0xff]
    %v185 = vld [vmem:[#allocation2 + $0x50] sm:$0xff]
    %v186 = vld [vmem:[#allocation2 + $0x58] sm:$0xff]
    %v187 = vld [vmem:[#allocation2 + $0x60] sm:$0xff]
    %v188 = vld [vmem:[#allocation2 + $0x68] sm:$0xff]
    %v189 = vld [vmem:[#allocation2 + $0x70] sm:$0xff]
    %v190 = vld [vmem:[#allocation2 + $0x78] sm:$0xff]
    %v191 = vld [vmem:[#allocation2 + $0x80] sm:$0xff]
    %v192 = vld [vmem:[#allocation2 + $0x88] sm:$0xff]
    %v193 = vld [vmem:[#allocation2 + $0x90] sm:$0xff]
    %v194 = vld [vmem:[#allocation2 + $0x98] sm:$0xff]
    %v195 = vld [vmem:[#allocation2 + $0xa0] sm:$0xff]
    %v196 = vld [vmem:[#allocation2 + $0xa8] sm:$0xff]
    %v197 = vld [vmem:[#allocation2 + $0xb0] sm:$0xff]
    %v198 = vld [vmem:[#allocation2 + $0xb8] sm:$0xff]
    %v199 = vld [vmem:[#allocation2 + $0xc0] sm:$0xff]
    %v200 = vld [vmem:[#allocation2 + $0xc8] sm:$0xff]
    %v201 = vld [vmem:[#allocation2 + $0xd0] sm:$0xff]
    %v202 = vld [vmem:[#allocation2 + $0xd8] sm:$0xff]
    %v203 = vld [vmem:[#allocation2 + $0xe0] sm:$0xff]
    %v204 = vld [vmem:[#allocation2 + $0xe8] sm:$0xff]
    %v205 = vld [vmem:[#allocation2 + $0xf0] sm:$0xff]
    %v206 = vld [vmem:[#allocation2 + $0xf8] sm:$0xff]
    %v207 = vld [vmem:[#allocation2 + $0x100] sm:$0xff]
    %v208 = vld [vmem:[#allocation2 + $0x108] sm:$0xff]
    %v209 = vld [vmem:[#allocation2 + $0x110] sm:$0xff]
    %v210 = vld [vmem:[#allocation2 + $0x118] sm:$0xff]
    %v211 = vld [vmem:[#allocation2 + $0x120] sm:$0xff]
    %v212 = vld [vmem:[#allocation2 + $0x128] sm:$0xff]
    %v213 = vld [vmem:[#allocation2 + $0x130] sm:$0xff]
    %v214 = vld [vmem:[#allocation2 + $0x138] sm:$0xff]
    %v215 = vld [vmem:[#allocation2 + $0x140] sm:$0xff]
    %v216 = vld [vmem:[#allocation2 + $0x148] sm:$0xff]
    %v217 = vld [vmem:[#allocation2 + $0x150] sm:$0xff]
    %v218 = vld [vmem:[#allocation2 + $0x158] sm:$0xff]
    %v219 = vld [vmem:[#allocation2 + $0x160] sm:$0xff]
    %v220 = vld [vmem:[#allocation2 + $0x168] sm:$0xff]
    %v221 = vld [vmem:[#allocation2 + $0x170] sm:$0xff]
    %v222 = vld [vmem:[#allocation2 + $0x178] sm:$0xff]
    %v223 = vld [vmem:[#allocation2 + $0x180] sm:$0xff]
    %v224 = vld [vmem:[#allocation2 + $0x188] sm:$0xff]
    %v225 = vld [vmem:[#allocation2 + $0x190] sm:$0xff]
    %v226 = vld [vmem:[#allocation2 + $0x198] sm:$0xff]
    %v227 = vld [vmem:[#allocation2 + $0x1a0] sm:$0xff]
    %v228 = vld [vmem:[#allocation2 + $0x1a8] sm:$0xff]
    %v229 = vld [vmem:[#allocation2 + $0x1b0] sm:$0xff]
    %v230 = vld [vmem:[#allocation2 + $0x1b8] sm:$0xff]
    %v231 = vld [vmem:[#allocation2 + $0x1c0] sm:$0xff]
    %v232 = vld [vmem:[#allocation2 + $0x1c8] sm:$0xff]
    %v233 = vld [vmem:[#allocation2 + $0x1d0] sm:$0xff]
    %v234 = vld [vmem:[#allocation2 + $0x1d8] sm:$0xff]
    %v235 = vld [vmem:[#allocation2 + $0x1e0] sm:$0xff]
    %v236 = vld [vmem:[#allocation2 + $0x1e8] sm:$0xff]
    %v237 = vld [vmem:[#allocation2 + $0x1f0] sm:$0xff]
    %v238 = vld [vmem:[#allocation2 + $0x1f8] sm:$0xff]
    %v239 = vld [vmem:[#allocation2 + $0x200] sm:$0xff]
    %v240 = vld [vmem:[#allocation2 + $0x208] sm:$0xff]
    %v241 = vld [vmem:[#allocation2 + $0x210] sm:$0xff]
    %v242 = vld [vmem:[#allocation2 + $0x218] sm:$0xff]
    %v243 = vld [vmem:[#allocation2 + $0x220] sm:$0xff]
    %v244 = vld [vmem:[#allocation2 + $0x228] sm:$0xff]
    %v245 = vld [vmem:[#allocation2 + $0x230] sm:$0xff]
    %v246 = vld [vmem:[#allocation2 + $0x238] sm:$0xff]
    %v247 = vld [vmem:[#allocation2 + $0x240] sm:$0xff]
    %v248 = vld [vmem:[#allocation2 + $0x248] sm:$0xff]
    %v249 = vld [vmem:[#allocation2 + $0x250] sm:$0xff]
    %v250 = vld [vmem:[#allocation2 + $0x258] sm:$0xff]
    %v251 = vld [vmem:[#allocation2 + $0x260] sm:$0xff]
    %v252 = vld [vmem:[#allocation2 + $0x268] sm:$0xff]
    %v253 = vld [vmem:[#allocation2 + $0x270] sm:$0xff]
    %v254 = vld [vmem:[#allocation2 + $0x278] sm:$0xff]
    %v255 = vld [vmem:[#allocation2 + $0x280] sm:$0xff]
    %v256 = vld [vmem:[#allocation2 + $0x288] sm:$0xff]
    %v257 = vld [vmem:[#allocation2 + $0x290] sm:$0xff]
    %v258 = vld [vmem:[#allocation2 + $0x298] sm:$0xff]
    %v259 = vld [vmem:[#allocation2 + $0x2a0] sm:$0xff]
    %v260 = vld [vmem:[#allocation2 + $0x2a8] sm:$0xff]
    %v261 = vld [vmem:[#allocation2 + $0x2b0] sm:$0xff]
    %v262 = vld [vmem:[#allocation2 + $0x2b8] sm:$0xff]
    %v263 = vld [vmem:[#allocation2 + $0x2c0] sm:$0xff]
    %v264 = vld [vmem:[#allocation2 + $0x2c8] sm:$0xff]
    %v265 = vld [vmem:[#allocation2 + $0x2d0] sm:$0xff]
    %v266 = vld [vmem:[#allocation2 + $0x2d8] sm:$0xff]
    %v267 = vld [vmem:[#allocation2 + $0x2e0] sm:$0xff]
    %v268 = vld [vmem:[#allocation2 + $0x2e8] sm:$0xff]
    %v269 = vld [vmem:[#allocation2 + $0x2f0] sm:$0xff]
    %v270 = vld [vmem:[#allocation2 + $0x2f8] sm:$0xff]
    %v271 = vld [vmem:[#allocation2 + $0x300] sm:$0xff]
    %v272 = vld [vmem:[#allocation2 + $0x308] sm:$0xff]
    %v273 = vld [vmem:[#allocation2 + $0x310] sm:$0xff]
    %v274 = vld [vmem:[#allocation2 + $0x318] sm:$0xff]
    %v275 = vld [vmem:[#allocation2 + $0x320] sm:$0xff]
    %v276 = vld [vmem:[#allocation2 + $0x328] sm:$0xff]
    %v277 = vld [vmem:[#allocation2 + $0x330] sm:$0xff]
    %v278 = vld [vmem:[#allocation2 + $0x338] sm:$0xff]
    %v279 = vld [vmem:[#allocation2 + $0x340] sm:$0xff]
    %v280 = vld [vmem:[#allocation2 + $0x348] sm:$0xff]
    %v281 = vld [vmem:[#allocation2 + $0x350] sm:$0xff]
    %v282 = vld [vmem:[#allocation2 + $0x358] sm:$0xff]
    %v283 = vld [vmem:[#allocation2 + $0x360] sm:$0xff]
    %v284 = vld [vmem:[#allocation2 + $0x368] sm:$0xff]
    %v285 = vld [vmem:[#allocation2 + $0x370] sm:$0xff]
    %v286 = vld [vmem:[#allocation2 + $0x378] sm:$0xff]
    %v287 = vld [vmem:[#allocation2 + $0x380] sm:$0xff]
    %v288 = vld [vmem:[#allocation2 + $0x388] sm:$0xff]
    %v289 = vld [vmem:[#allocation2 + $0x390] sm:$0xff]
    %v290 = vld [vmem:[#allocation2 + $0x398] sm:$0xff]
    %v291 = vld [vmem:[#allocation2 + $0x3a0] sm:$0xff]
    %v292 = vld [vmem:[#allocation2 + $0x3a8] sm:$0xff]
    %v293 = vld [vmem:[#allocation2 + $0x3b0] sm:$0xff]
    %v294 = vld [vmem:[#allocation2 + $0x3b8] sm:$0xff]
    %v295 = vld [vmem:[#allocation2 + $0x3c0] sm:$0xff]
    %v296 = vld [vmem:[#allocation2 + $0x3c8] sm:$0xff]
    %v297 = vld [vmem:[#allocation2 + $0x3d0] sm:$0xff]
    %v298 = vld [vmem:[#allocation2 + $0x3d8] sm:$0xff]
    %v299 = vld [vmem:[#allocation2 + $0x3e0] sm:$0xff]
    %v300 = vld [vmem:[#allocation2 + $0x3e8] sm:$0xff]
    %v301 = vld [vmem:[#allocation2 + $0x3f0] sm:$0xff]
    %v302 = vld [vmem:[#allocation2 + $0x3f8] sm:$0xff]
    %v303 = vld [vmem:[#allocation3] sm:$0xff]
    %v304 = vld [vmem:[#allocation3 + $0x8] sm:$0xff]
    %v305 = vld [vmem:[#allocation3 + $0x10] sm:$0xff]
    %v306 = vld [vmem:[#allocation3 + $0x18] sm:$0xff]
    %v307 = vld [vmem:[#allocation3 + $0x20] sm:$0xff]
    %v308 = vld [vmem:[#allocation3 + $0x28] sm:$0xff]
    %v309 = vld [vmem:[#allocation3 + $0x30] sm:$0xff]
    %v310 = vld [vmem:[#allocation3 + $0x38] sm:$0xff]
    %v311 = vld [vmem:[#allocation3 + $0x40] sm:$0xff]
    %v312 = vld [vmem:[#allocation3 + $0x48] sm:$0xff]
    %v313 = vld [vmem:[#allocation3 + $0x50] sm:$0xff]
    %v314 = vld [vmem:[#allocation3 + $0x58] sm:$0xff]
    %v315 = vld [vmem:[#allocation3 + $0x60] sm:$0xff]
    %v316 = vld [vmem:[#allocation3 + $0x68] sm:$0xff]
    %v317 = vld [vmem:[#allocation3 + $0x70] sm:$0xff]
    %v318 = vld [vmem:[#allocation3 + $0x78] sm:$0xff]
    %v319 = vld [vmem:[#allocation3 + $0x80] sm:$0xff]
    %v320 = vld [vmem:[#allocation3 + $0x88] sm:$0xff]
    %v321 = vld [vmem:[#allocation3 + $0x90] sm:$0xff]
    %v322 = vld [vmem:[#allocation3 + $0x98] sm:$0xff]
    %v323 = vld [vmem:[#allocation3 + $0xa0] sm:$0xff]
    %v324 = vld [vmem:[#allocation3 + $0xa8] sm:$0xff]
    %v325 = vld [vmem:[#allocation3 + $0xb0] sm:$0xff]
    %v326 = vld [vmem:[#allocation3 + $0xb8] sm:$0xff]
    %v327 = vld [vmem:[#allocation3 + $0xc0] sm:$0xff]
    %v328 = vld [vmem:[#allocation3 + $0xc8] sm:$0xff]
    %v329 = vld [vmem:[#allocation3 + $0xd0] sm:$0xff]
    %v330 = vld [vmem:[#allocation3 + $0xd8] sm:$0xff]
    %v331 = vld [vmem:[#allocation3 + $0xe0] sm:$0xff]
    %v332 = vld [vmem:[#allocation3 + $0xe8] sm:$0xff]
    %v333 = vld [vmem:[#allocation3 + $0xf0] sm:$0xff]
    %v334 = vld [vmem:[#allocation3 + $0xf8] sm:$0xff]
    %v335 = vld [vmem:[#allocation3 + $0x100] sm:$0xff]
    %v336 = vld [vmem:[#allocation3 + $0x108] sm:$0xff]
    %v337 = vld [vmem:[#allocation3 + $0x110] sm:$0xff]
    %v338 = vld [vmem:[#allocation3 + $0x118] sm:$0xff]
    %v339 = vld [vmem:[#allocation3 + $0x120] sm:$0xff]
    %v340 = vld [vmem:[#allocation3 + $0x128] sm:$0xff]
    %v341 = vld [vmem:[#allocation3 + $0x130] sm:$0xff]
    %v342 = vld [vmem:[#allocation3 + $0x138] sm:$0xff]
    %v343 = vld [vmem:[#allocation3 + $0x140] sm:$0xff]
    %v344 = vld [vmem:[#allocation3 + $0x148] sm:$0xff]
    %v345 = vld [vmem:[#allocation3 + $0x150] sm:$0xff]
    %v346 = vld [vmem:[#allocation3 + $0x158] sm:$0xff]
    %v347 = vld [vmem:[#allocation3 + $0x160] sm:$0xff]
    %v348 = vld [vmem:[#allocation3 + $0x168] sm:$0xff]
    %v349 = vld [vmem:[#allocation3 + $0x170] sm:$0xff]
    %v350 = vld [vmem:[#allocation3 + $0x178] sm:$0xff]
    %v351 = vld [vmem:[#allocation3 + $0x180] sm:$0xff]
    %v352 = vld [vmem:[#allocation3 + $0x188] sm:$0xff]
    %v353 = vld [vmem:[#allocation3 + $0x190] sm:$0xff]
    %v354 = vld [vmem:[#allocation3 + $0x198] sm:$0xff]
    %v355 = vld [vmem:[#allocation3 + $0x1a0] sm:$0xff]
    %v356 = vld [vmem:[#allocation3 + $0x1a8] sm:$0xff]
    %v357 = vld [vmem:[#allocation3 + $0x1b0] sm:$0xff]
    %v358 = vld [vmem:[#allocation3 + $0x1b8] sm:$0xff]
    %v359 = vld [vmem:[#allocation3 + $0x1c0] sm:$0xff]
    %v360 = vld [vmem:[#allocation3 + $0x1c8] sm:$0xff]
    %v361 = vld [vmem:[#allocation3 + $0x1d0] sm:$0xff]
    %v362 = vld [vmem:[#allocation3 + $0x1d8] sm:$0xff]
    %v363 = vld [vmem:[#allocation3 + $0x1e0] sm:$0xff]
    %v364 = vld [vmem:[#allocation3 + $0x1e8] sm:$0xff]
    %v365 = vld [vmem:[#allocation3 + $0x1f0] sm:$0xff]
    %v366 = vld [vmem:[#allocation3 + $0x1f8] sm:$0xff]
    %v367 = vld [vmem:[#allocation6] sm:$0xff]
    %v368 = vld [vmem:[#allocation6 + $0x8] sm:$0xff]
    %v369 = vld [vmem:[#allocation6 + $0x10] sm:$0xff]
    %v370 = vld [vmem:[#allocation6 + $0x18] sm:$0xff]
    %v371 = vld [vmem:[#allocation6 + $0x20] sm:$0xff]
    %v372 = vld [vmem:[#allocation6 + $0x28] sm:$0xff]
    %v373 = vld [vmem:[#allocation6 + $0x30] sm:$0xff]
    %v374 = vld [vmem:[#allocation6 + $0x38] sm:$0xff]
    %v375 = vld [vmem:[#allocation6 + $0x40] sm:$0xff]
    %v376 = vld [vmem:[#allocation6 + $0x48] sm:$0xff]
    %v377 = vld [vmem:[#allocation6 + $0x50] sm:$0xff]
    %v378 = vld [vmem:[#allocation6 + $0x58] sm:$0xff]
    %v379 = vld [vmem:[#allocation6 + $0x60] sm:$0xff]
    %v380 = vld [vmem:[#allocation6 + $0x68] sm:$0xff]
    %v381 = vld [vmem:[#allocation6 + $0x70] sm:$0xff]
    %v382 = vld [vmem:[#allocation6 + $0x78] sm:$0xff]
    %v383 = vld [vmem:[#allocation6 + $0x80] sm:$0xff]
    %v384 = vld [vmem:[#allocation6 + $0x88] sm:$0xff]
    %v385 = vld [vmem:[#allocation6 + $0x90] sm:$0xff]
    %v386 = vld [vmem:[#allocation6 + $0x98] sm:$0xff]
    %v387 = vld [vmem:[#allocation6 + $0xa0] sm:$0xff]
    %v388 = vld [vmem:[#allocation6 + $0xa8] sm:$0xff]
    %v389 = vld [vmem:[#allocation6 + $0xb0] sm:$0xff]
    %v390 = vld [vmem:[#allocation6 + $0xb8] sm:$0xff]
    %v391 = vld [vmem:[#allocation6 + $0xc0] sm:$0xff]
    %v392 = vld [vmem:[#allocation6 + $0xc8] sm:$0xff]
    %v393 = vld [vmem:[#allocation6 + $0xd0] sm:$0xff]
    %v394 = vld [vmem:[#allocation6 + $0xd8] sm:$0xff]
    %v395 = vld [vmem:[#allocation6 + $0xe0] sm:$0xff]
    %v396 = vld [vmem:[#allocation6 + $0xe8] sm:$0xff]
    %v397 = vld [vmem:[#allocation6 + $0xf0] sm:$0xff]
    %v398 = vld [vmem:[#allocation6 + $0xf8] sm:$0xff]
    %v463 = vunpack.c.l.b16 %v303
    %v464 = vunpack.c.h.b16 %v303
    %v465 = vunpack.c.l.b16 %v304
    %v466 = vunpack.c.h.b16 %v304
    %v467 = vunpack.c.l.b16 %v305
    %v468 = vunpack.c.h.b16 %v305
    %v469 = vunpack.c.l.b16 %v306
    %v470 = vunpack.c.h.b16 %v306
    %v471 = vunpack.c.l.b16 %v307
    %v472 = vunpack.c.h.b16 %v307
    %v473 = vunpack.c.l.b16 %v308
    %v474 = vunpack.c.h.b16 %v308
    %v475 = vunpack.c.l.b16 %v309
    %v476 = vunpack.c.h.b16 %v309
    %v477 = vunpack.c.l.b16 %v310
    %v478 = vunpack.c.h.b16 %v310
    %v479 = vunpack.c.l.b16 %v311
    %v480 = vunpack.c.h.b16 %v311
    %v481 = vunpack.c.l.b16 %v312
    %v482 = vunpack.c.h.b16 %v312
    %v483 = vunpack.c.l.b16 %v313
    %v484 = vunpack.c.h.b16 %v313
    %v485 = vunpack.c.l.b16 %v314
    %v486 = vunpack.c.h.b16 %v314
    %v487 = vunpack.c.l.b16 %v315
    %v488 = vunpack.c.h.b16 %v315
    %v489 = vunpack.c.l.b16 %v316
    %v490 = vunpack.c.h.b16 %v316
    %v491 = vunpack.c.l.b16 %v317
    %v492 = vunpack.c.h.b16 %v317
    %v493 = vunpack.c.l.b16 %v318
    %v494 = vunpack.c.h.b16 %v318
    %v495 = vunpack.c.l.b16 %v319
    %v496 = vunpack.c.h.b16 %v319
    %v497 = vunpack.c.l.b16 %v320
    %v498 = vunpack.c.h.b16 %v320
    %v499 = vunpack.c.l.b16 %v321
    %v500 = vunpack.c.h.b16 %v321
    %v501 = vunpack.c.l.b16 %v322
    %v502 = vunpack.c.h.b16 %v322
    %v503 = vunpack.c.l.b16 %v323
    %v504 = vunpack.c.h.b16 %v323
    %v505 = vunpack.c.l.b16 %v324
    %v506 = vunpack.c.h.b16 %v324
    %v507 = vunpack.c.l.b16 %v325
    %v508 = vunpack.c.h.b16 %v325
    %v509 = vunpack.c.l.b16 %v326
    %v510 = vunpack.c.h.b16 %v326
    %v511 = vunpack.c.l.b16 %v327
    %v512 = vunpack.c.h.b16 %v327
    %v513 = vunpack.c.l.b16 %v328
    %v514 = vunpack.c.h.b16 %v328
    %v515 = vunpack.c.l.b16 %v329
    %v516 = vunpack.c.h.b16 %v329
    %v517 = vunpack.c.l.b16 %v330
    %v518 = vunpack.c.h.b16 %v330
    %v519 = vunpack.c.l.b16 %v331
    %v520 = vunpack.c.h.b16 %v331
    %v521 = vunpack.c.l.b16 %v332
    %v522 = vunpack.c.h.b16 %v332
    %v523 = vunpack.c.l.b16 %v333
    %v524 = vunpack.c.h.b16 %v333
    %v525 = vunpack.c.l.b16 %v334
    %v526 = vunpack.c.h.b16 %v334
    %v527 = vunpack.c.l.b16 %v335
    %v528 = vunpack.c.h.b16 %v335
    %v529 = vunpack.c.l.b16 %v336
    %v530 = vunpack.c.h.b16 %v336
    %v531 = vunpack.c.l.b16 %v337
    %v532 = vunpack.c.h.b16 %v337
    %v533 = vunpack.c.l.b16 %v338
    %v534 = vunpack.c.h.b16 %v338
    %v535 = vunpack.c.l.b16 %v339
    %v536 = vunpack.c.h.b16 %v339
    %v537 = vunpack.c.l.b16 %v340
    %v538 = vunpack.c.h.b16 %v340
    %v539 = vunpack.c.l.b16 %v341
    %v540 = vunpack.c.h.b16 %v341
    %v541 = vunpack.c.l.b16 %v342
    %v542 = vunpack.c.h.b16 %v342
    %v543 = vunpack.c.l.b16 %v343
    %v544 = vunpack.c.h.b16 %v343
    %v545 = vunpack.c.l.b16 %v344
    %v546 = vunpack.c.h.b16 %v344
    %v547 = vunpack.c.l.b16 %v345
    %v548 = vunpack.c.h.b16 %v345
    %v549 = vunpack.c.l.b16 %v346
    %v550 = vunpack.c.h.b16 %v346
    %v551 = vunpack.c.l.b16 %v347
    %v552 = vunpack.c.h.b16 %v347
    %v553 = vunpack.c.l.b16 %v348
    %v554 = vunpack.c.h.b16 %v348
    %v555 = vunpack.c.l.b16 %v349
    %v556 = vunpack.c.h.b16 %v349
    %v557 = vunpack.c.l.b16 %v350
    %v558 = vunpack.c.h.b16 %v350
    %v559 = vunpack.c.l.b16 %v351
    %v560 = vunpack.c.h.b16 %v351
    %v561 = vunpack.c.l.b16 %v352
    %v562 = vunpack.c.h.b16 %v352
    %v563 = vunpack.c.l.b16 %v353
    %v564 = vunpack.c.h.b16 %v353
    %v565 = vunpack.c.l.b16 %v354
    %v566 = vunpack.c.h.b16 %v354
    %v567 = vunpack.c.l.b16 %v355
    %v568 = vunpack.c.h.b16 %v355
    %v569 = vunpack.c.l.b16 %v356
    %v570 = vunpack.c.h.b16 %v356
    %v571 = vunpack.c.l.b16 %v357
    %v572 = vunpack.c.h.b16 %v357
    %v573 = vunpack.c.l.b16 %v358
    %v574 = vunpack.c.h.b16 %v358
    %v575 = vunpack.c.l.b16 %v359
    %v576 = vunpack.c.h.b16 %v359
    %v577 = vunpack.c.l.b16 %v360
    %v578 = vunpack.c.h.b16 %v360
    %v579 = vunpack.c.l.b16 %v361
    %v580 = vunpack.c.h.b16 %v361
    %v581 = vunpack.c.l.b16 %v362
    %v582 = vunpack.c.h.b16 %v362
    %v583 = vunpack.c.l.b16 %v363
    %v584 = vunpack.c.h.b16 %v363
    %v585 = vunpack.c.l.b16 %v364
    %v586 = vunpack.c.h.b16 %v364
    %v587 = vunpack.c.l.b16 %v365
    %v588 = vunpack.c.h.b16 %v365
    %v589 = vunpack.c.l.b16 %v366
    %v590 = vunpack.c.h.b16 %v366
    %v591 = vpack.c.b16 %v465, %v463
    %v592 = vpack.c.b16 %v466, %v464
    %v593 = vpack.c.b16 %v469, %v467
    %v594 = vpack.c.b16 %v470, %v468
    %v595 = vpack.c.b16 %v473, %v471
    %v596 = vpack.c.b16 %v474, %v472
    %v597 = vpack.c.b16 %v477, %v475
    %v598 = vpack.c.b16 %v478, %v476
    %v599 = vpack.c.b16 %v481, %v479
    %v600 = vpack.c.b16 %v482, %v480
    %v601 = vpack.c.b16 %v485, %v483
    %v602 = vpack.c.b16 %v486, %v484
    %v603 = vpack.c.b16 %v489, %v487
    %v604 = vpack.c.b16 %v490, %v488
    %v605 = vpack.c.b16 %v493, %v491
    %v606 = vpack.c.b16 %v494, %v492
    %v607 = vpack.c.b16 %v497, %v495
    %v608 = vpack.c.b16 %v498, %v496
    %v609 = vpack.c.b16 %v501, %v499
    %v610 = vpack.c.b16 %v502, %v500
    %v611 = vpack.c.b16 %v505, %v503
    %v612 = vpack.c.b16 %v506, %v504
    %v613 = vpack.c.b16 %v509, %v507
    %v614 = vpack.c.b16 %v510, %v508
    %v615 = vpack.c.b16 %v513, %v511
    %v616 = vpack.c.b16 %v514, %v512
    %v617 = vpack.c.b16 %v517, %v515
    %v618 = vpack.c.b16 %v518, %v516
    %v619 = vpack.c.b16 %v521, %v519
    %v620 = vpack.c.b16 %v522, %v520
    %v621 = vpack.c.b16 %v525, %v523
    %v622 = vpack.c.b16 %v526, %v524
    %v623 = vpack.c.b16 %v529, %v527
    %v624 = vpack.c.b16 %v530, %v528
    %v625 = vpack.c.b16 %v533, %v531
    %v626 = vpack.c.b16 %v534, %v532
    %v627 = vpack.c.b16 %v537, %v535
    %v628 = vpack.c.b16 %v538, %v536
    %v629 = vpack.c.b16 %v541, %v539
    %v630 = vpack.c.b16 %v542, %v540
    %v631 = vpack.c.b16 %v545, %v543
    %v632 = vpack.c.b16 %v546, %v544
    %v633 = vpack.c.b16 %v549, %v547
    %v634 = vpack.c.b16 %v550, %v548
    %v635 = vpack.c.b16 %v553, %v551
    %v636 = vpack.c.b16 %v554, %v552
    %v637 = vpack.c.b16 %v557, %v555
    %v638 = vpack.c.b16 %v558, %v556
    %v639 = vpack.c.b16 %v561, %v559
    %v640 = vpack.c.b16 %v562, %v560
    %v641 = vpack.c.b16 %v565, %v563
    %v642 = vpack.c.b16 %v566, %v564
    %v643 = vpack.c.b16 %v569, %v567
    %v644 = vpack.c.b16 %v570, %v568
    %v645 = vpack.c.b16 %v573, %v571
    %v646 = vpack.c.b16 %v574, %v572
    %v647 = vpack.c.b16 %v577, %v575
    %v648 = vpack.c.b16 %v578, %v576
    %v649 = vpack.c.b16 %v581, %v579
    %v650 = vpack.c.b16 %v582, %v580
    %v651 = vpack.c.b16 %v585, %v583
    %v652 = vpack.c.b16 %v586, %v584
    %v653 = vpack.c.b16 %v589, %v587
    %v654 = vpack.c.b16 %v590, %v588
    %v751 = vunpack.c.l.b16 %v367
    %v752 = vunpack.c.h.b16 %v367
    %v753 = vunpack.c.l.b16 %v368
    %v754 = vunpack.c.h.b16 %v368
    %v755 = vunpack.c.l.b16 %v369
    %v756 = vunpack.c.h.b16 %v369
    %v757 = vunpack.c.l.b16 %v370
    %v758 = vunpack.c.h.b16 %v370
    %v759 = vunpack.c.l.b16 %v371
    %v760 = vunpack.c.h.b16 %v371
    %v761 = vunpack.c.l.b16 %v372
    %v762 = vunpack.c.h.b16 %v372
    %v763 = vunpack.c.l.b16 %v373
    %v764 = vunpack.c.h.b16 %v373
    %v765 = vunpack.c.l.b16 %v374
    %v766 = vunpack.c.h.b16 %v374
    %v767 = vunpack.c.l.b16 %v375
    %v768 = vunpack.c.h.b16 %v375
    %v769 = vunpack.c.l.b16 %v376
    %v770 = vunpack.c.h.b16 %v376
    %v771 = vunpack.c.l.b16 %v377
    %v772 = vunpack.c.h.b16 %v377
    %v773 = vunpack.c.l.b16 %v378
    %v774 = vunpack.c.h.b16 %v378
    %v775 = vunpack.c.l.b16 %v379
    %v776 = vunpack.c.h.b16 %v379
    %v777 = vunpack.c.l.b16 %v380
    %v778 = vunpack.c.h.b16 %v380
    %v779 = vunpack.c.l.b16 %v381
    %v780 = vunpack.c.h.b16 %v381
    %v781 = vunpack.c.l.b16 %v382
    %v782 = vunpack.c.h.b16 %v382
    %v783 = vunpack.c.l.b16 %v383
    %v784 = vunpack.c.h.b16 %v383
    %v785 = vunpack.c.l.b16 %v384
    %v786 = vunpack.c.h.b16 %v384
    %v787 = vunpack.c.l.b16 %v385
    %v788 = vunpack.c.h.b16 %v385
    %v789 = vunpack.c.l.b16 %v386
    %v790 = vunpack.c.h.b16 %v386
    %v791 = vunpack.c.l.b16 %v387
    %v792 = vunpack.c.h.b16 %v387
    %v793 = vunpack.c.l.b16 %v388
    %v794 = vunpack.c.h.b16 %v388
    %v795 = vunpack.c.l.b16 %v389
    %v796 = vunpack.c.h.b16 %v389
    %v797 = vunpack.c.l.b16 %v390
    %v798 = vunpack.c.h.b16 %v390
    %v799 = vunpack.c.l.b16 %v391
    %v800 = vunpack.c.h.b16 %v391
    %v801 = vunpack.c.l.b16 %v392
    %v802 = vunpack.c.h.b16 %v392
    %v803 = vunpack.c.l.b16 %v393
    %v804 = vunpack.c.h.b16 %v393
    %v805 = vunpack.c.l.b16 %v394
    %v806 = vunpack.c.h.b16 %v394
    %v807 = vunpack.c.l.b16 %v395
    %v808 = vunpack.c.h.b16 %v395
    %v809 = vunpack.c.l.b16 %v396
    %v810 = vunpack.c.h.b16 %v396
    %v811 = vunpack.c.l.b16 %v397
    %v812 = vunpack.c.h.b16 %v397
    %v813 = vunpack.c.l.b16 %v398
    %v814 = vunpack.c.h.b16 %v398
    %v815 = vpack.c.b16 %v753, %v751
    %v816 = vpack.c.b16 %v754, %v752
    %v817 = vpack.c.b16 %v757, %v755
    %v818 = vpack.c.b16 %v758, %v756
    %v819 = vpack.c.b16 %v761, %v759
    %v820 = vpack.c.b16 %v762, %v760
    %v821 = vpack.c.b16 %v765, %v763
    %v822 = vpack.c.b16 %v766, %v764
    %v823 = vpack.c.b16 %v769, %v767
    %v824 = vpack.c.b16 %v770, %v768
    %v825 = vpack.c.b16 %v773, %v771
    %v826 = vpack.c.b16 %v774, %v772
    %v827 = vpack.c.b16 %v777, %v775
    %v828 = vpack.c.b16 %v778, %v776
    %v829 = vpack.c.b16 %v781, %v779
    %v830 = vpack.c.b16 %v782, %v780
    %v831 = vpack.c.b16 %v785, %v783
    %v832 = vpack.c.b16 %v786, %v784
    %v833 = vpack.c.b16 %v789, %v787
    %v834 = vpack.c.b16 %v790, %v788
    %v835 = vpack.c.b16 %v793, %v791
    %v836 = vpack.c.b16 %v794, %v792
    %v837 = vpack.c.b16 %v797, %v795
    %v838 = vpack.c.b16 %v798, %v796
    %v839 = vpack.c.b16 %v801, %v799
    %v840 = vpack.c.b16 %v802, %v800
    %v841 = vpack.c.b16 %v805, %v803
    %v842 = vpack.c.b16 %v806, %v804
    %v843 = vpack.c.b16 %v809, %v807
    %v844 = vpack.c.b16 %v810, %v808
    %v845 = vpack.c.b16 %v813, %v811
    %v846 = vpack.c.b16 %v814, %v812
    %879 = vmatprep.subr.bf16.mxu0 %v816
    %880 = vmatpush1.bf16.msra.mxu0 %v815
    %881 = vmatprep.subr.bf16.mxu0 %v818
    %882 = vmatpush1.bf16.msra.mxu0 %v817
    %883 = vmatprep.subr.bf16.mxu0 %v820
    %884 = vmatpush1.bf16.msra.mxu0 %v819
    %885 = vmatprep.subr.bf16.mxu0 %v822
    %886 = vmatpush1.bf16.msra.mxu0 %v821
    %887 = vmatprep.subr.bf16.mxu0 %v824
    %888 = vmatpush1.bf16.msra.mxu0 %v823
    %889 = vmatprep.subr.bf16.mxu0 %v826
    %890 = vmatpush1.bf16.msra.mxu0 %v825
    %891 = vmatprep.subr.bf16.mxu0 %v828
    %892 = vmatpush1.bf16.msra.mxu0 %v827
    %893 = vmatprep.subr.bf16.mxu0 %v830
    %894 = vmatpush1.bf16.msra.mxu0 %v829
    %895 = vmatprep.subr.bf16.mxu0 %v832
    %896 = vmatpush1.bf16.msra.mxu0 %v831
    %897 = vmatprep.subr.bf16.mxu0 %v834
    %898 = vmatpush1.bf16.msra.mxu0 %v833
    %899 = vmatprep.subr.bf16.mxu0 %v836
    %900 = vmatpush1.bf16.msra.mxu0 %v835
    %901 = vmatprep.subr.bf16.mxu0 %v838
    %902 = vmatpush1.bf16.msra.mxu0 %v837
    %903 = vmatprep.subr.bf16.mxu0 %v840
    %904 = vmatpush1.bf16.msra.mxu0 %v839
    %905 = vmatprep.subr.bf16.mxu0 %v842
    %906 = vmatpush1.bf16.msra.mxu0 %v841
    %907 = vmatprep.subr.bf16.mxu0 %v844
    %908 = vmatpush1.bf16.msra.mxu0 %v843
    %909 = vmatprep.subr.bf16.mxu0 %v846
    %910 = vmatpush1.bf16.msra.mxu0 %v845
    %911 = vmatprep.mubr.bf16.mxu0 %v592
    %912 = vmatmul.mubr.bf16.gmra.mrb[0].mxu0 %v591
    %v913 = vpop.f32.mrb[0].mxu0
    %v914 = vadd.f32 0.0, %v913
    %v915 = vpop.f32.mrb[0].mxu0
    %v916 = vadd.f32 0.0, %v915
    %v917 = vpop.f32.mrb[0].mxu0
    %v918 = vadd.f32 0.0, %v917
    %v919 = vpop.f32.mrb[0].mxu0
    %v920 = vadd.f32 0.0, %v919
    %921 = vmatprep.mubr.bf16.mxu0 %v594
    %922 = vmatmul.mubr.bf16.gmra.mrb[0].mxu0 %v593
    %v923 = vpop.f32.mrb[0].mxu0
    %v924 = vadd.f32 0.0, %v923
    %v925 = vpop.f32.mrb[0].mxu0
    %v926 = vadd.f32 0.0, %v925
    %v927 = vpop.f32.mrb[0].mxu0
    %v928 = vadd.f32 0.0, %v927
    %v929 = vpop.f32.mrb[0].mxu0
    %v930 = vadd.f32 0.0, %v929
    %931 = vmatprep.mubr.bf16.mxu0 %v596
    %932 = vmatmul.mubr.bf16.gmra.mrb[0].mxu0 %v595
    %v933 = vpop.f32.mrb[0].mxu0
    %v934 = vadd.f32 0.0, %v933
    %v935 = vpop.f32.mrb[0].mxu0
    %v936 = vadd.f32 0.0, %v935
    %v937 = vpop.f32.mrb[0].mxu0
    %v938 = vadd.f32 0.0, %v937
    %v939 = vpop.f32.mrb[0].mxu0
    %v940 = vadd.f32 0.0, %v939
    %941 = vmatprep.mubr.bf16.mxu0 %v598
    %942 = vmatmul.mubr.bf16.gmra.mrb[0].mxu0 %v597
    %v943 = vpop.f32.mrb[0].mxu0
    %v944 = vadd.f32 0.0, %v943
    %v945 = vpop.f32.mrb[0].mxu0
    %v946 = vadd.f32 0.0, %v945
    %v947 = vpop.f32.mrb[0].mxu0
    %v948 = vadd.f32 0.0, %v947
    %v949 = vpop.f32.mrb[0].mxu0
    %v950 = vadd.f32 0.0, %v949
    %951 = vmatprep.mubr.bf16.mxu0 %v600
    %952 = vmatmul.mubr.bf16.gmra.mrb[0].mxu0 %v599
    %v953 = vpop.f32.mrb[0].mxu0
    %v954 = vadd.f32 0.0, %v953
    %v955 = vpop.f32.mrb[0].mxu0
    %v956 = vadd.f32 0.0, %v955
    %v957 = vpop.f32.mrb[0].mxu0
    %v958 = vadd.f32 0.0, %v957
    %v959 = vpop.f32.mrb[0].mxu0
    %v960 = vadd.f32 0.0, %v959
    %961 = vmatprep.mubr.bf16.mxu0 %v602
    %962 = vmatmul.mubr.bf16.gmra.mrb[0].mxu0 %v601
    %v963 = vpop.f32.mrb[0].mxu0
    %v964 = vadd.f32 0.0, %v963
    %v965 = vpop.f32.mrb[0].mxu0
    %v966 = vadd.f32 0.0, %v965
    %v967 = vpop.f32.mrb[0].mxu0
    %v968 = vadd.f32 0.0, %v967
    %v969 = vpop.f32.mrb[0].mxu0
    %v970 = vadd.f32 0.0, %v969
    %971 = vmatprep.mubr.bf16.mxu0 %v604
    %972 = vmatmul.mubr.bf16.gmra.mrb[0].mxu0 %v603
    %v973 = vpop.f32.mrb[0].mxu0
    %v974 = vadd.f32 0.0, %v973
    %v975 = vpop.f32.mrb[0].mxu0
    %v976 = vadd.f32 0.0, %v975
    %v977 = vpop.f32.mrb[0].mxu0
    %v978 = vadd.f32 0.0, %v977
    %v979 = vpop.f32.mrb[0].mxu0
    %v980 = vadd.f32 0.0, %v979
    %981 = vmatprep.mubr.bf16.mxu0 %v606
    %982 = vmatmul.mubr.bf16.gmra.mrb[0].mxu0 %v605
    %v983 = vpop.f32.mrb[0].mxu0
    %v984 = vadd.f32 0.0, %v983
    %v985 = vpop.f32.mrb[0].mxu0
    %v986 = vadd.f32 0.0, %v985
    %v987 = vpop.f32.mrb[0].mxu0
    %v988 = vadd.f32 0.0, %v987
    %v989 = vpop.f32.mrb[0].mxu0
    %v990 = vadd.f32 0.0, %v989
    %991 = vmatprep.mubr.bf16.mxu0 %v608
    %992 = vmatmul.mubr.bf16.gmra.mrb[0].mxu0 %v607
    %v993 = vpop.f32.mrb[0].mxu0
    %v994 = vadd.f32 0.0, %v993
    %v995 = vpop.f32.mrb[0].mxu0
    %v996 = vadd.f32 0.0, %v995
    %v997 = vpop.f32.mrb[0].mxu0
    %v998 = vadd.f32 0.0, %v997
    %v999 = vpop.f32.mrb[0].mxu0
    %v1000 = vadd.f32 0.0, %v999
    %1001 = vmatprep.mubr.bf16.mxu0 %v610
    %1002 = vmatmul.mubr.bf16.gmra.mrb[0].mxu0 %v609
    %v1003 = vpop.f32.mrb[0].mxu0
    %v1004 = vadd.f32 0.0, %v1003
    %v1005 = vpop.f32.mrb[0].mxu0
    %v1006 = vadd.f32 0.0, %v1005
    %v1007 = vpop.f32.mrb[0].mxu0
    %v1008 = vadd.f32 0.0, %v1007
    %v1009 = vpop.f32.mrb[0].mxu0
    %v1010 = vadd.f32 0.0, %v1009
    %1011 = vmatprep.mubr.bf16.mxu0 %v612
    %1012 = vmatmul.mubr.bf16.gmra.mrb[0].mxu0 %v611
    %v1013 = vpop.f32.mrb[0].mxu0
    %v1014 = vadd.f32 0.0, %v1013
    %v1015 = vpop.f32.mrb[0].mxu0
    %v1016 = vadd.f32 0.0, %v1015
    %v1017 = vpop.f32.mrb[0].mxu0
    %v1018 = vadd.f32 0.0, %v1017
    %v1019 = vpop.f32.mrb[0].mxu0
    %v1020 = vadd.f32 0.0, %v1019
    %1021 = vmatprep.mubr.bf16.mxu0 %v614
    %1022 = vmatmul.mubr.bf16.gmra.mrb[0].mxu0 %v613
    %v1023 = vpop.f32.mrb[0].mxu0
    %v1024 = vadd.f32 0.0, %v1023
    %v1025 = vpop.f32.mrb[0].mxu0
    %v1026 = vadd.f32 0.0, %v1025
    %v1027 = vpop.f32.mrb[0].mxu0
    %v1028 = vadd.f32 0.0, %v1027
    %v1029 = vpop.f32.mrb[0].mxu0
    %v1030 = vadd.f32 0.0, %v1029
    %1031 = vmatprep.mubr.bf16.mxu0 %v616
    %1032 = vmatmul.mubr.bf16.gmra.mrb[0].mxu0 %v615
    %v1033 = vpop.f32.mrb[0].mxu0
    %v1034 = vadd.f32 0.0, %v1033
    %v1035 = vpop.f32.mrb[0].mxu0
    %v1036 = vadd.f32 0.0, %v1035
    %v1037 = vpop.f32.mrb[0].mxu0
    %v1038 = vadd.f32 0.0, %v1037
    %v1039 = vpop.f32.mrb[0].mxu0
    %v1040 = vadd.f32 0.0, %v1039
    %1041 = vmatprep.mubr.bf16.mxu0 %v618
    %1042 = vmatmul.mubr.bf16.gmra.mrb[0].mxu0 %v617
    %v1043 = vpop.f32.mrb[0].mxu0
    %v1044 = vadd.f32 0.0, %v1043
    %v1045 = vpop.f32.mrb[0].mxu0
    %v1046 = vadd.f32 0.0, %v1045
    %v1047 = vpop.f32.mrb[0].mxu0
    %v1048 = vadd.f32 0.0, %v1047
    %v1049 = vpop.f32.mrb[0].mxu0
    %v1050 = vadd.f32 0.0, %v1049
    %1051 = vmatprep.mubr.bf16.mxu0 %v620
    %1052 = vmatmul.mubr.bf16.gmra.mrb[0].mxu0 %v619
    %v1053 = vpop.f32.mrb[0].mxu0
    %v1054 = vadd.f32 0.0, %v1053
    %v1055 = vpop.f32.mrb[0].mxu0
    %v1056 = vadd.f32 0.0, %v1055
    %v1057 = vpop.f32.mrb[0].mxu0
    %v1058 = vadd.f32 0.0, %v1057
    %v1059 = vpop.f32.mrb[0].mxu0
    %v1060 = vadd.f32 0.0, %v1059
    %1061 = vmatprep.mubr.bf16.mxu0 %v622
    %1062 = vmatmul.mubr.bf16.gmra.mrb[0].mxu0 %v621
    %v1063 = vpop.f32.mrb[0].mxu0
    %v1064 = vadd.f32 0.0, %v1063
    %v1065 = vpop.f32.mrb[0].mxu0
    %v1066 = vadd.f32 0.0, %v1065
    %v1067 = vpop.f32.mrb[0].mxu0
    %v1068 = vadd.f32 0.0, %v1067
    %v1069 = vpop.f32.mrb[0].mxu0
    %v1070 = vadd.f32 0.0, %v1069
    %1071 = vmatprep.mubr.bf16.mxu0 %v624
    %1072 = vmatmul.mubr.bf16.gmra.mrb[0].mxu0 %v623
    %v1073 = vpop.f32.mrb[0].mxu0
    %v1074 = vadd.f32 0.0, %v1073
    %v1075 = vpop.f32.mrb[0].mxu0
    %v1076 = vadd.f32 0.0, %v1075
    %v1077 = vpop.f32.mrb[0].mxu0
    %v1078 = vadd.f32 0.0, %v1077
    %v1079 = vpop.f32.mrb[0].mxu0
    %v1080 = vadd.f32 0.0, %v1079
    %1081 = vmatprep.mubr.bf16.mxu0 %v626
    %1082 = vmatmul.mubr.bf16.gmra.mrb[0].mxu0 %v625
    %v1083 = vpop.f32.mrb[0].mxu0
    %v1084 = vadd.f32 0.0, %v1083
    %v1085 = vpop.f32.mrb[0].mxu0
    %v1086 = vadd.f32 0.0, %v1085
    %v1087 = vpop.f32.mrb[0].mxu0
    %v1088 = vadd.f32 0.0, %v1087
    %v1089 = vpop.f32.mrb[0].mxu0
    %v1090 = vadd.f32 0.0, %v1089
    %1091 = vmatprep.mubr.bf16.mxu0 %v628
    %1092 = vmatmul.mubr.bf16.gmra.mrb[0].mxu0 %v627
    %v1093 = vpop.f32.mrb[0].mxu0
    %v1094 = vadd.f32 0.0, %v1093
    %v1095 = vpop.f32.mrb[0].mxu0
    %v1096 = vadd.f32 0.0, %v1095
    %v1097 = vpop.f32.mrb[0].mxu0
    %v1098 = vadd.f32 0.0, %v1097
    %v1099 = vpop.f32.mrb[0].mxu0
    %v1100 = vadd.f32 0.0, %v1099
    %1101 = vmatprep.mubr.bf16.mxu0 %v630
    %1102 = vmatmul.mubr.bf16.gmra.mrb[0].mxu0 %v629
    %v1103 = vpop.f32.mrb[0].mxu0
    %v1104 = vadd.f32 0.0, %v1103
    %v1105 = vpop.f32.mrb[0].mxu0
    %v1106 = vadd.f32 0.0, %v1105
    %v1107 = vpop.f32.mrb[0].mxu0
    %v1108 = vadd.f32 0.0, %v1107
    %v1109 = vpop.f32.mrb[0].mxu0
    %v1110 = vadd.f32 0.0, %v1109
    %1111 = vmatprep.mubr.bf16.mxu0 %v632
    %1112 = vmatmul.mubr.bf16.gmra.mrb[0].mxu0 %v631
    %v1113 = vpop.f32.mrb[0].mxu0
    %v1114 = vadd.f32 0.0, %v1113
    %v1115 = vpop.f32.mrb[0].mxu0
    %v1116 = vadd.f32 0.0, %v1115
    %v1117 = vpop.f32.mrb[0].mxu0
    %v1118 = vadd.f32 0.0, %v1117
    %v1119 = vpop.f32.mrb[0].mxu0
    %v1120 = vadd.f32 0.0, %v1119
    %1121 = vmatprep.mubr.bf16.mxu0 %v634
    %1122 = vmatmul.mubr.bf16.gmra.mrb[0].mxu0 %v633
    %v1123 = vpop.f32.mrb[0].mxu0
    %v1124 = vadd.f32 0.0, %v1123
    %v1125 = vpop.f32.mrb[0].mxu0
    %v1126 = vadd.f32 0.0, %v1125
    %v1127 = vpop.f32.mrb[0].mxu0
    %v1128 = vadd.f32 0.0, %v1127
    %v1129 = vpop.f32.mrb[0].mxu0
    %v1130 = vadd.f32 0.0, %v1129
    %1131 = vmatprep.mubr.bf16.mxu0 %v636
    %1132 = vmatmul.mubr.bf16.gmra.mrb[0].mxu0 %v635
    %v1133 = vpop.f32.mrb[0].mxu0
    %v1134 = vadd.f32 0.0, %v1133
    %v1135 = vpop.f32.mrb[0].mxu0
    %v1136 = vadd.f32 0.0, %v1135
    %v1137 = vpop.f32.mrb[0].mxu0
    %v1138 = vadd.f32 0.0, %v1137
    %v1139 = vpop.f32.mrb[0].mxu0
    %v1140 = vadd.f32 0.0, %v1139
    %1141 = vmatprep.mubr.bf16.mxu0 %v638
    %1142 = vmatmul.mubr.bf16.gmra.mrb[0].mxu0 %v637
    %v1143 = vpop.f32.mrb[0].mxu0
    %v1144 = vadd.f32 0.0, %v1143
    %v1145 = vpop.f32.mrb[0].mxu0
    %v1146 = vadd.f32 0.0, %v1145
    %v1147 = vpop.f32.mrb[0].mxu0
    %v1148 = vadd.f32 0.0, %v1147
    %v1149 = vpop.f32.mrb[0].mxu0
    %v1150 = vadd.f32 0.0, %v1149
    %1151 = vmatprep.mubr.bf16.mxu0 %v640
    %1152 = vmatmul.mubr.bf16.gmra.mrb[0].mxu0 %v639
    %v1153 = vpop.f32.mrb[0].mxu0
    %v1154 = vadd.f32 0.0, %v1153
    %v1155 = vpop.f32.mrb[0].mxu0
    %v1156 = vadd.f32 0.0, %v1155
    %v1157 = vpop.f32.mrb[0].mxu0
    %v1158 = vadd.f32 0.0, %v1157
    %v1159 = vpop.f32.mrb[0].mxu0
    %v1160 = vadd.f32 0.0, %v1159
    %1161 = vmatprep.mubr.bf16.mxu0 %v642
    %1162 = vmatmul.mubr.bf16.gmra.mrb[0].mxu0 %v641
    %v1163 = vpop.f32.mrb[0].mxu0
    %v1164 = vadd.f32 0.0, %v1163
    %v1165 = vpop.f32.mrb[0].mxu0
    %v1166 = vadd.f32 0.0, %v1165
    %v1167 = vpop.f32.mrb[0].mxu0
    %v1168 = vadd.f32 0.0, %v1167
    %v1169 = vpop.f32.mrb[0].mxu0
    %v1170 = vadd.f32 0.0, %v1169
    %1171 = vmatprep.mubr.bf16.mxu0 %v644
    %1172 = vmatmul.mubr.bf16.gmra.mrb[0].mxu0 %v643
    %v1173 = vpop.f32.mrb[0].mxu0
    %v1174 = vadd.f32 0.0, %v1173
    %v1175 = vpop.f32.mrb[0].mxu0
    %v1176 = vadd.f32 0.0, %v1175
    %v1177 = vpop.f32.mrb[0].mxu0
    %v1178 = vadd.f32 0.0, %v1177
    %v1179 = vpop.f32.mrb[0].mxu0
    %v1180 = vadd.f32 0.0, %v1179
    %1181 = vmatprep.mubr.bf16.mxu0 %v646
    %1182 = vmatmul.mubr.bf16.gmra.mrb[0].mxu0 %v645
    %v1183 = vpop.f32.mrb[0].mxu0
    %v1184 = vadd.f32 0.0, %v1183
    %v1185 = vpop.f32.mrb[0].mxu0
    %v1186 = vadd.f32 0.0, %v1185
    %v1187 = vpop.f32.mrb[0].mxu0
    %v1188 = vadd.f32 0.0, %v1187
    %v1189 = vpop.f32.mrb[0].mxu0
    %v1190 = vadd.f32 0.0, %v1189
    %1191 = vmatprep.mubr.bf16.mxu0 %v648
    %1192 = vmatmul.mubr.bf16.gmra.mrb[0].mxu0 %v647
    %v1193 = vpop.f32.mrb[0].mxu0
    %v1194 = vadd.f32 0.0, %v1193
    %v1195 = vpop.f32.mrb[0].mxu0
    %v1196 = vadd.f32 0.0, %v1195
    %v1197 = vpop.f32.mrb[0].mxu0
    %v1198 = vadd.f32 0.0, %v1197
    %v1199 = vpop.f32.mrb[0].mxu0
    %v1200 = vadd.f32 0.0, %v1199
    %1201 = vmatprep.mubr.bf16.mxu0 %v650
    %1202 = vmatmul.mubr.bf16.gmra.mrb[0].mxu0 %v649
    %v1203 = vpop.f32.mrb[0].mxu0
    %v1204 = vadd.f32 0.0, %v1203
    %v1205 = vpop.f32.mrb[0].mxu0
    %v1206 = vadd.f32 0.0, %v1205
    %v1207 = vpop.f32.mrb[0].mxu0
    %v1208 = vadd.f32 0.0, %v1207
    %v1209 = vpop.f32.mrb[0].mxu0
    %v1210 = vadd.f32 0.0, %v1209
    %1211 = vmatprep.mubr.bf16.mxu0 %v652
    %1212 = vmatmul.mubr.bf16.gmra.mrb[0].mxu0 %v651
    %v1213 = vpop.f32.mrb[0].mxu0
    %v1214 = vadd.f32 0.0, %v1213
    %v1215 = vpop.f32.mrb[0].mxu0
    %v1216 = vadd.f32 0.0, %v1215
    %v1217 = vpop.f32.mrb[0].mxu0
    %v1218 = vadd.f32 0.0, %v1217
    %v1219 = vpop.f32.mrb[0].mxu0
    %v1220 = vadd.f32 0.0, %v1219
    %1221 = vmatprep.mubr.bf16.mxu0 %v654
    %1222 = vmatmul.mubr.bf16.gmra.mrb[0].mxu0 %v653
    %v1223 = vpop.f32.mrb[0].mxu0
    %v1224 = vadd.f32 0.0, %v1223
    %v1225 = vpop.f32.mrb[0].mxu0
    %v1226 = vadd.f32 0.0, %v1225
    %v1227 = vpop.f32.mrb[0].mxu0
    %v1228 = vadd.f32 0.0, %v1227
    %v1229 = vpop.f32.mrb[0].mxu0
    %v1230 = vadd.f32 0.0, %v1229
    %1231 = vdwg.mxu0
    %v1232 = vadd.f32 %v175, %v914
    %v1233 = vadd.f32 %v176, %v916
    %v1234 = vadd.f32 %v177, %v918
    %v1235 = vadd.f32 %v178, %v920
    %v1236 = vadd.f32 %v179, %v924
    %v1237 = vadd.f32 %v180, %v926
    %v1238 = vadd.f32 %v181, %v928
    %v1239 = vadd.f32 %v182, %v930
    %v1240 = vadd.f32 %v183, %v934
    %v1241 = vadd.f32 %v184, %v936
    %v1242 = vadd.f32 %v185, %v938
    %v1243 = vadd.f32 %v186, %v940
    %v1244 = vadd.f32 %v187, %v944
    %v1245 = vadd.f32 %v188, %v946
    %v1246 = vadd.f32 %v189, %v948
    %v1247 = vadd.f32 %v190, %v950
    %v1248 = vadd.f32 %v191, %v954
    %v1249 = vadd.f32 %v192, %v956
    %v1250 = vadd.f32 %v193, %v958
    %v1251 = vadd.f32 %v194, %v960
    %v1252 = vadd.f32 %v195, %v964
    %v1253 = vadd.f32 %v196, %v966
    %v1254 = vadd.f32 %v197, %v968
    %v1255 = vadd.f32 %v198, %v970
    %v1256 = vadd.f32 %v199, %v974
    %v1257 = vadd.f32 %v200, %v976
    %v1258 = vadd.f32 %v201, %v978
    %v1259 = vadd.f32 %v202, %v980
    %v1260 = vadd.f32 %v203, %v984
    %v1261 = vadd.f32 %v204, %v986
    %v1262 = vadd.f32 %v205, %v988
    %v1263 = vadd.f32 %v206, %v990
    %v1264 = vadd.f32 %v207, %v994
    %v1265 = vadd.f32 %v208, %v996
    %v1266 = vadd.f32 %v209, %v998
    %v1267 = vadd.f32 %v210, %v1000
    %v1268 = vadd.f32 %v211, %v1004
    %v1269 = vadd.f32 %v212, %v1006
    %v1270 = vadd.f32 %v213, %v1008
    %v1271 = vadd.f32 %v214, %v1010
    %v1272 = vadd.f32 %v215, %v1014
    %v1273 = vadd.f32 %v216, %v1016
    %v1274 = vadd.f32 %v217, %v1018
    %v1275 = vadd.f32 %v218, %v1020
    %v1276 = vadd.f32 %v219, %v1024
    %v1277 = vadd.f32 %v220, %v1026
    %v1278 = vadd.f32 %v221, %v1028
    %v1279 = vadd.f32 %v222, %v1030
    %v1280 = vadd.f32 %v223, %v1034
    %v1281 = vadd.f32 %v224, %v1036
    %v1282 = vadd.f32 %v225, %v1038
    %v1283 = vadd.f32 %v226, %v1040
    %v1284 = vadd.f32 %v227, %v1044
    %v1285 = vadd.f32 %v228, %v1046
    %v1286 = vadd.f32 %v229, %v1048
    %v1287 = vadd.f32 %v230, %v1050
    %v1288 = vadd.f32 %v231, %v1054
    %v1289 = vadd.f32 %v232, %v1056
    %v1290 = vadd.f32 %v233, %v1058
    %v1291 = vadd.f32 %v234, %v1060
    %v1292 = vadd.f32 %v235, %v1064
    %v1293 = vadd.f32 %v236, %v1066
    %v1294 = vadd.f32 %v237, %v1068
    %v1295 = vadd.f32 %v238, %v1070
    %v1296 = vadd.f32 %v239, %v1074
    %v1297 = vadd.f32 %v240, %v1076
    %v1298 = vadd.f32 %v241, %v1078
    %v1299 = vadd.f32 %v242, %v1080
    %v1300 = vadd.f32 %v243, %v1084
    %v1301 = vadd.f32 %v244, %v1086
    %v1302 = vadd.f32 %v245, %v1088
    %v1303 = vadd.f32 %v246, %v1090
    %v1304 = vadd.f32 %v247, %v1094
    %v1305 = vadd.f32 %v248, %v1096
    %v1306 = vadd.f32 %v249, %v1098
    %v1307 = vadd.f32 %v250, %v1100
    %v1308 = vadd.f32 %v251, %v1104
    %v1309 = vadd.f32 %v252, %v1106
    %v1310 = vadd.f32 %v253, %v1108
    %v1311 = vadd.f32 %v254, %v1110
    %v1312 = vadd.f32 %v255, %v1114
    %v1313 = vadd.f32 %v256, %v1116
    %v1314 = vadd.f32 %v257, %v1118
    %v1315 = vadd.f32 %v258, %v1120
    %v1316 = vadd.f32 %v259, %v1124
    %v1317 = vadd.f32 %v260, %v1126
    %v1318 = vadd.f32 %v261, %v1128
    %v1319 = vadd.f32 %v262, %v1130
    %v1320 = vadd.f32 %v263, %v1134
    %v1321 = vadd.f32 %v264, %v1136
    %v1322 = vadd.f32 %v265, %v1138
    %v1323 = vadd.f32 %v266, %v1140
    %v1324 = vadd.f32 %v267, %v1144
    %v1325 = vadd.f32 %v268, %v1146
    %v1326 = vadd.f32 %v269, %v1148
    %v1327 = vadd.f32 %v270, %v1150
    %v1328 = vadd.f32 %v271, %v1154
    %v1329 = vadd.f32 %v272, %v1156
    %v1330 = vadd.f32 %v273, %v1158
    %v1331 = vadd.f32 %v274, %v1160
    %v1332 = vadd.f32 %v275, %v1164
    %v1333 = vadd.f32 %v276, %v1166
    %v1334 = vadd.f32 %v277, %v1168
    %v1335 = vadd.f32 %v278, %v1170
    %v1336 = vadd.f32 %v279, %v1174
    %v1337 = vadd.f32 %v280, %v1176
    %v1338 = vadd.f32 %v281, %v1178
    %v1339 = vadd.f32 %v282, %v1180
    %v1340 = vadd.f32 %v283, %v1184
    %v1341 = vadd.f32 %v284, %v1186
    %v1342 = vadd.f32 %v285, %v1188
    %v1343 = vadd.f32 %v286, %v1190
    %v1344 = vadd.f32 %v287, %v1194
    %v1345 = vadd.f32 %v288, %v1196
    %v1346 = vadd.f32 %v289, %v1198
    %v1347 = vadd.f32 %v290, %v1200
    %v1348 = vadd.f32 %v291, %v1204
    %v1349 = vadd.f32 %v292, %v1206
    %v1350 = vadd.f32 %v293, %v1208
    %v1351 = vadd.f32 %v294, %v1210
    %v1352 = vadd.f32 %v295, %v1214
    %v1353 = vadd.f32 %v296, %v1216
    %v1354 = vadd.f32 %v297, %v1218
    %v1355 = vadd.f32 %v298, %v1220
    %v1356 = vadd.f32 %v299, %v1224
    %v1357 = vadd.f32 %v300, %v1226
    %v1358 = vadd.f32 %v301, %v1228
    %v1359 = vadd.f32 %v302, %v1230
    %1360 = vst [vmem:[#allocation2] sm:$0xff] %v1232
    %1361 = vst [vmem:[#allocation2 + $0x8] sm:$0xff] %v1233
    %1362 = vst [vmem:[#allocation2 + $0x10] sm:$0xff] %v1234
    %1363 = vst [vmem:[#allocation2 + $0x18] sm:$0xff] %v1235
    %1364 = vst [vmem:[#allocation2 + $0x20] sm:$0xff] %v1236
    %1365 = vst [vmem:[#allocation2 + $0x28] sm:$0xff] %v1237
    %1366 = vst [vmem:[#allocation2 + $0x30] sm:$0xff] %v1238
    %1367 = vst [vmem:[#allocation2 + $0x38] sm:$0xff] %v1239
    %1368 = vst [vmem:[#allocation2 + $0x40] sm:$0xff] %v1240
    %1369 = vst [vmem:[#allocation2 + $0x48] sm:$0xff] %v1241
    %1370 = vst [vmem:[#allocation2 + $0x50] sm:$0xff] %v1242
    %1371 = vst [vmem:[#allocation2 + $0x58] sm:$0xff] %v1243
    %1372 = vst [vmem:[#allocation2 + $0x60] sm:$0xff] %v1244
    %1373 = vst [vmem:[#allocation2 + $0x68] sm:$0xff] %v1245
    %1374 = vst [vmem:[#allocation2 + $0x70] sm:$0xff] %v1246
    %1375 = vst [vmem:[#allocation2 + $0x78] sm:$0xff] %v1247
    %1376 = vst [vmem:[#allocation2 + $0x80] sm:$0xff] %v1248
    %1377 = vst [vmem:[#allocation2 + $0x88] sm:$0xff] %v1249
    %1378 = vst [vmem:[#allocation2 + $0x90] sm:$0xff] %v1250
    %1379 = vst [vmem:[#allocation2 + $0x98] sm:$0xff] %v1251
    %1380 = vst [vmem:[#allocation2 + $0xa0] sm:$0xff] %v1252
    %1381 = vst [vmem:[#allocation2 + $0xa8] sm:$0xff] %v1253
    %1382 = vst [vmem:[#allocation2 + $0xb0] sm:$0xff] %v1254
    %1383 = vst [vmem:[#allocation2 + $0xb8] sm:$0xff] %v1255
    %1384 = vst [vmem:[#allocation2 + $0xc0] sm:$0xff] %v1256
    %1385 = vst [vmem:[#allocation2 + $0xc8] sm:$0xff] %v1257
    %1386 = vst [vmem:[#allocation2 + $0xd0] sm:$0xff] %v1258
    %1387 = vst [vmem:[#allocation2 + $0xd8] sm:$0xff] %v1259
    %1388 = vst [vmem:[#allocation2 + $0xe0] sm:$0xff] %v1260
    %1389 = vst [vmem:[#allocation2 + $0xe8] sm:$0xff] %v1261
    %1390 = vst [vmem:[#allocation2 + $0xf0] sm:$0xff] %v1262
    %1391 = vst [vmem:[#allocation2 + $0xf8] sm:$0xff] %v1263
    %1392 = vst [vmem:[#allocation2 + $0x100] sm:$0xff] %v1264
    %1393 = vst [vmem:[#allocation2 + $0x108] sm:$0xff] %v1265
    %1394 = vst [vmem:[#allocation2 + $0x110] sm:$0xff] %v1266
    %1395 = vst [vmem:[#allocation2 + $0x118] sm:$0xff] %v1267
    %1396 = vst [vmem:[#allocation2 + $0x120] sm:$0xff] %v1268
    %1397 = vst [vmem:[#allocation2 + $0x128] sm:$0xff] %v1269
    %1398 = vst [vmem:[#allocation2 + $0x130] sm:$0xff] %v1270
    %1399 = vst [vmem:[#allocation2 + $0x138] sm:$0xff] %v1271
    %1400 = vst [vmem:[#allocation2 + $0x140] sm:$0xff] %v1272
    %1401 = vst [vmem:[#allocation2 + $0x148] sm:$0xff] %v1273
    %1402 = vst [vmem:[#allocation2 + $0x150] sm:$0xff] %v1274
    %1403 = vst [vmem:[#allocation2 + $0x158] sm:$0xff] %v1275
    %1404 = vst [vmem:[#allocation2 + $0x160] sm:$0xff] %v1276
    %1405 = vst [vmem:[#allocation2 + $0x168] sm:$0xff] %v1277
    %1406 = vst [vmem:[#allocation2 + $0x170] sm:$0xff] %v1278
    %1407 = vst [vmem:[#allocation2 + $0x178] sm:$0xff] %v1279
    %1408 = vst [vmem:[#allocation2 + $0x180] sm:$0xff] %v1280
    %1409 = vst [vmem:[#allocation2 + $0x188] sm:$0xff] %v1281
    %1410 = vst [vmem:[#allocation2 + $0x190] sm:$0xff] %v1282
    %1411 = vst [vmem:[#allocation2 + $0x198] sm:$0xff] %v1283
    %1412 = vst [vmem:[#allocation2 + $0x1a0] sm:$0xff] %v1284
    %1413 = vst [vmem:[#allocation2 + $0x1a8] sm:$0xff] %v1285
    %1414 = vst [vmem:[#allocation2 + $0x1b0] sm:$0xff] %v1286
    %1415 = vst [vmem:[#allocation2 + $0x1b8] sm:$0xff] %v1287
    %1416 = vst [vmem:[#allocation2 + $0x1c0] sm:$0xff] %v1288
    %1417 = vst [vmem:[#allocation2 + $0x1c8] sm:$0xff] %v1289
    %1418 = vst [vmem:[#allocation2 + $0x1d0] sm:$0xff] %v1290
    %1419 = vst [vmem:[#allocation2 + $0x1d8] sm:$0xff] %v1291
    %1420 = vst [vmem:[#allocation2 + $0x1e0] sm:$0xff] %v1292
    %1421 = vst [vmem:[#allocation2 + $0x1e8] sm:$0xff] %v1293
    %1422 = vst [vmem:[#allocation2 + $0x1f0] sm:$0xff] %v1294
    %1423 = vst [vmem:[#allocation2 + $0x1f8] sm:$0xff] %v1295
    %1424 = vst [vmem:[#allocation2 + $0x200] sm:$0xff] %v1296
    %1425 = vst [vmem:[#allocation2 + $0x208] sm:$0xff] %v1297
    %1426 = vst [vmem:[#allocation2 + $0x210] sm:$0xff] %v1298
    %1427 = vst [vmem:[#allocation2 + $0x218] sm:$0xff] %v1299
    %1428 = vst [vmem:[#allocation2 + $0x220] sm:$0xff] %v1300
    %1429 = vst [vmem:[#allocation2 + $0x228] sm:$0xff] %v1301
    %1430 = vst [vmem:[#allocation2 + $0x230] sm:$0xff] %v1302
    %1431 = vst [vmem:[#allocation2 + $0x238] sm:$0xff] %v1303
    %1432 = vst [vmem:[#allocation2 + $0x240] sm:$0xff] %v1304
    %1433 = vst [vmem:[#allocation2 + $0x248] sm:$0xff] %v1305
    %1434 = vst [vmem:[#allocation2 + $0x250] sm:$0xff] %v1306
    %1435 = vst [vmem:[#allocation2 + $0x258] sm:$0xff] %v1307
    %1436 = vst [vmem:[#allocation2 + $0x260] sm:$0xff] %v1308
    %1437 = vst [vmem:[#allocation2 + $0x268] sm:$0xff] %v1309
    %1438 = vst [vmem:[#allocation2 + $0x270] sm:$0xff] %v1310
    %1439 = vst [vmem:[#allocation2 + $0x278] sm:$0xff] %v1311
    %1440 = vst [vmem:[#allocation2 + $0x280] sm:$0xff] %v1312
    %1441 = vst [vmem:[#allocation2 + $0x288] sm:$0xff] %v1313
    %1442 = vst [vmem:[#allocation2 + $0x290] sm:$0xff] %v1314
    %1443 = vst [vmem:[#allocation2 + $0x298] sm:$0xff] %v1315
    %1444 = vst [vmem:[#allocation2 + $0x2a0] sm:$0xff] %v1316
    %1445 = vst [vmem:[#allocation2 + $0x2a8] sm:$0xff] %v1317
    %1446 = vst [vmem:[#allocation2 + $0x2b0] sm:$0xff] %v1318
    %1447 = vst [vmem:[#allocation2 + $0x2b8] sm:$0xff] %v1319
    %1448 = vst [vmem:[#allocation2 + $0x2c0] sm:$0xff] %v1320
    %1449 = vst [vmem:[#allocation2 + $0x2c8] sm:$0xff] %v1321
    %1450 = vst [vmem:[#allocation2 + $0x2d0] sm:$0xff] %v1322
    %1451 = vst [vmem:[#allocation2 + $0x2d8] sm:$0xff] %v1323
    %1452 = vst [vmem:[#allocation2 + $0x2e0] sm:$0xff] %v1324
    %1453 = vst [vmem:[#allocation2 + $0x2e8] sm:$0xff] %v1325
    %1454 = vst [vmem:[#allocation2 + $0x2f0] sm:$0xff] %v1326
    %1455 = vst [vmem:[#allocation2 + $0x2f8] sm:$0xff] %v1327
    %1456 = vst [vmem:[#allocation2 + $0x300] sm:$0xff] %v1328
    %1457 = vst [vmem:[#allocation2 + $0x308] sm:$0xff] %v1329
    %1458 = vst [vmem:[#allocation2 + $0x310] sm:$0xff] %v1330
    %1459 = vst [vmem:[#allocation2 + $0x318] sm:$0xff] %v1331
    %1460 = vst [vmem:[#allocation2 + $0x320] sm:$0xff] %v1332
    %1461 = vst [vmem:[#allocation2 + $0x328] sm:$0xff] %v1333
    %1462 = vst [vmem:[#allocation2 + $0x330] sm:$0xff] %v1334
    %1463 = vst [vmem:[#allocation2 + $0x338] sm:$0xff] %v1335
    %1464 = vst [vmem:[#allocation2 + $0x340] sm:$0xff] %v1336
    %1465 = vst [vmem:[#allocation2 + $0x348] sm:$0xff] %v1337
    %1466 = vst [vmem:[#allocation2 + $0x350] sm:$0xff] %v1338
    %1467 = vst [vmem:[#allocation2 + $0x358] sm:$0xff] %v1339
    %1468 = vst [vmem:[#allocation2 + $0x360] sm:$0xff] %v1340
    %1469 = vst [vmem:[#allocation2 + $0x368] sm:$0xff] %v1341
    %1470 = vst [vmem:[#allocation2 + $0x370] sm:$0xff] %v1342
    %1471 = vst [vmem:[#allocation2 + $0x378] sm:$0xff] %v1343
    %1472 = vst [vmem:[#allocation2 + $0x380] sm:$0xff] %v1344
    %1473 = vst [vmem:[#allocation2 + $0x388] sm:$0xff] %v1345
    %1474 = vst [vmem:[#allocation2 + $0x390] sm:$0xff] %v1346
    %1475 = vst [vmem:[#allocation2 + $0x398] sm:$0xff] %v1347
    %1476 = vst [vmem:[#allocation2 + $0x3a0] sm:$0xff] %v1348
    %1477 = vst [vmem:[#allocation2 + $0x3a8] sm:$0xff] %v1349
    %1478 = vst [vmem:[#allocation2 + $0x3b0] sm:$0xff] %v1350
    %1479 = vst [vmem:[#allocation2 + $0x3b8] sm:$0xff] %v1351
    %1480 = vst [vmem:[#allocation2 + $0x3c0] sm:$0xff] %v1352
    %1481 = vst [vmem:[#allocation2 + $0x3c8] sm:$0xff] %v1353
    %1482 = vst [vmem:[#allocation2 + $0x3d0] sm:$0xff] %v1354
    %1483 = vst [vmem:[#allocation2 + $0x3d8] sm:$0xff] %v1355
    %1484 = vst [vmem:[#allocation2 + $0x3e0] sm:$0xff] %v1356
    %1485 = vst [vmem:[#allocation2 + $0x3e8] sm:$0xff] %v1357
    %1486 = vst [vmem:[#allocation2 + $0x3f0] sm:$0xff] %v1358
    %1487 = vst [vmem:[#allocation2 + $0x3f8] sm:$0xff] %v1359
    // Predicated region
    $region26: #{tpu_custom_call.1} parent=1 // pred_check
      %p1488 = pneg %p43
    $region27: #{tpu_custom_call.1} parent=1 // pred_check_branch
      %1490 = sbr.rel (%p1488) target = $region29
    $region28: #{tpu_custom_call.1} parent=1 // pred_region
      %v1491 = vld [vmem:[#allocation2] sm:$0xff]
      %v1492 = vld [vmem:[#allocation2 + $0x8] sm:$0xff]
      %v1493 = vld [vmem:[#allocation2 + $0x10] sm:$0xff]
      %v1494 = vld [vmem:[#allocation2 + $0x18] sm:$0xff]
      %v1495 = vld [vmem:[#allocation2 + $0x20] sm:$0xff]
      %v1496 = vld [vmem:[#allocation2 + $0x28] sm:$0xff]
      %v1497 = vld [vmem:[#allocation2 + $0x30] sm:$0xff]
      %v1498 = vld [vmem:[#allocation2 + $0x38] sm:$0xff]
      %v1499 = vld [vmem:[#allocation2 + $0x40] sm:$0xff]
      %v1500 = vld [vmem:[#allocation2 + $0x48] sm:$0xff]
      %v1501 = vld [vmem:[#allocation2 + $0x50] sm:$0xff]
      %v1502 = vld [vmem:[#allocation2 + $0x58] sm:$0xff]
      %v1503 = vld [vmem:[#allocation2 + $0x60] sm:$0xff]
      %v1504 = vld [vmem:[#allocation2 + $0x68] sm:$0xff]
      %v1505 = vld [vmem:[#allocation2 + $0x70] sm:$0xff]
      %v1506 = vld [vmem:[#allocation2 + $0x78] sm:$0xff]
      %v1507 = vld [vmem:[#allocation2 + $0x80] sm:$0xff]
      %v1508 = vld [vmem:[#allocation2 + $0x88] sm:$0xff]
      %v1509 = vld [vmem:[#allocation2 + $0x90] sm:$0xff]
      %v1510 = vld [vmem:[#allocation2 + $0x98] sm:$0xff]
      %v1511 = vld [vmem:[#allocation2 + $0xa0] sm:$0xff]
      %v1512 = vld [vmem:[#allocation2 + $0xa8] sm:$0xff]
      %v1513 = vld [vmem:[#allocation2 + $0xb0] sm:$0xff]
      %v1514 = vld [vmem:[#allocation2 + $0xb8] sm:$0xff]
      %v1515 = vld [vmem:[#allocation2 + $0xc0] sm:$0xff]
      %v1516 = vld [vmem:[#allocation2 + $0xc8] sm:$0xff]
      %v1517 = vld [vmem:[#allocation2 + $0xd0] sm:$0xff]
      %v1518 = vld [vmem:[#allocation2 + $0xd8] sm:$0xff]
      %v1519 = vld [vmem:[#allocation2 + $0xe0] sm:$0xff]
      %v1520 = vld [vmem:[#allocation2 + $0xe8] sm:$0xff]
      %v1521 = vld [vmem:[#allocation2 + $0xf0] sm:$0xff]
      %v1522 = vld [vmem:[#allocation2 + $0xf8] sm:$0xff]
      %v1523 = vld [vmem:[#allocation2 + $0x100] sm:$0xff]
      %v1524 = vld [vmem:[#allocation2 + $0x108] sm:$0xff]
      %v1525 = vld [vmem:[#allocation2 + $0x110] sm:$0xff]
      %v1526 = vld [vmem:[#allocation2 + $0x118] sm:$0xff]
      %v1527 = vld [vmem:[#allocation2 + $0x120] sm:$0xff]
      %v1528 = vld [vmem:[#allocation2 + $0x128] sm:$0xff]
      %v1529 = vld [vmem:[#allocation2 + $0x130] sm:$0xff]
      %v1530 = vld [vmem:[#allocation2 + $0x138] sm:$0xff]
      %v1531 = vld [vmem:[#allocation2 + $0x140] sm:$0xff]
      %v1532 = vld [vmem:[#allocation2 + $0x148] sm:$0xff]
      %v1533 = vld [vmem:[#allocation2 + $0x150] sm:$0xff]
      %v1534 = vld [vmem:[#allocation2 + $0x158] sm:$0xff]
      %v1535 = vld [vmem:[#allocation2 + $0x160] sm:$0xff]
      %v1536 = vld [vmem:[#allocation2 + $0x168] sm:$0xff]
      %v1537 = vld [vmem:[#allocation2 + $0x170] sm:$0xff]
      %v1538 = vld [vmem:[#allocation2 + $0x178] sm:$0xff]
      %v1539 = vld [vmem:[#allocation2 + $0x180] sm:$0xff]
      %v1540 = vld [vmem:[#allocation2 + $0x188] sm:$0xff]
      %v1541 = vld [vmem:[#allocation2 + $0x190] sm:$0xff]
      %v1542 = vld [vmem:[#allocation2 + $0x198] sm:$0xff]
      %v1543 = vld [vmem:[#allocation2 + $0x1a0] sm:$0xff]
      %v1544 = vld [vmem:[#allocation2 + $0x1a8] sm:$0xff]
      %v1545 = vld [vmem:[#allocation2 + $0x1b0] sm:$0xff]
      %v1546 = vld [vmem:[#allocation2 + $0x1b8] sm:$0xff]
      %v1547 = vld [vmem:[#allocation2 + $0x1c0] sm:$0xff]
      %v1548 = vld [vmem:[#allocation2 + $0x1c8] sm:$0xff]
      %v1549 = vld [vmem:[#allocation2 + $0x1d0] sm:$0xff]
      %v1550 = vld [vmem:[#allocation2 + $0x1d8] sm:$0xff]
      %v1551 = vld [vmem:[#allocation2 + $0x1e0] sm:$0xff]
      %v1552 = vld [vmem:[#allocation2 + $0x1e8] sm:$0xff]
      %v1553 = vld [vmem:[#allocation2 + $0x1f0] sm:$0xff]
      %v1554 = vld [vmem:[#allocation2 + $0x1f8] sm:$0xff]
      %v1555 = vld [vmem:[#allocation2 + $0x200] sm:$0xff]
      %v1556 = vld [vmem:[#allocation2 + $0x208] sm:$0xff]
      %v1557 = vld [vmem:[#allocation2 + $0x210] sm:$0xff]
      %v1558 = vld [vmem:[#allocation2 + $0x218] sm:$0xff]
      %v1559 = vld [vmem:[#allocation2 + $0x220] sm:$0xff]
      %v1560 = vld [vmem:[#allocation2 + $0x228] sm:$0xff]
      %v1561 = vld [vmem:[#allocation2 + $0x230] sm:$0xff]
      %v1562 = vld [vmem:[#allocation2 + $0x238] sm:$0xff]
      %v1563 = vld [vmem:[#allocation2 + $0x240] sm:$0xff]
      %v1564 = vld [vmem:[#allocation2 + $0x248] sm:$0xff]
      %v1565 = vld [vmem:[#allocation2 + $0x250] sm:$0xff]
      %v1566 = vld [vmem:[#allocation2 + $0x258] sm:$0xff]
      %v1567 = vld [vmem:[#allocation2 + $0x260] sm:$0xff]
      %v1568 = vld [vmem:[#allocation2 + $0x268] sm:$0xff]
      %v1569 = vld [vmem:[#allocation2 + $0x270] sm:$0xff]
      %v1570 = vld [vmem:[#allocation2 + $0x278] sm:$0xff]
      %v1571 = vld [vmem:[#allocation2 + $0x280] sm:$0xff]
      %v1572 = vld [vmem:[#allocation2 + $0x288] sm:$0xff]
      %v1573 = vld [vmem:[#allocation2 + $0x290] sm:$0xff]
      %v1574 = vld [vmem:[#allocation2 + $0x298] sm:$0xff]
      %v1575 = vld [vmem:[#allocation2 + $0x2a0] sm:$0xff]
      %v1576 = vld [vmem:[#allocation2 + $0x2a8] sm:$0xff]
      %v1577 = vld [vmem:[#allocation2 + $0x2b0] sm:$0xff]
      %v1578 = vld [vmem:[#allocation2 + $0x2b8] sm:$0xff]
      %v1579 = vld [vmem:[#allocation2 + $0x2c0] sm:$0xff]
      %v1580 = vld [vmem:[#allocation2 + $0x2c8] sm:$0xff]
      %v1581 = vld [vmem:[#allocation2 + $0x2d0] sm:$0xff]
      %v1582 = vld [vmem:[#allocation2 + $0x2d8] sm:$0xff]
      %v1583 = vld [vmem:[#allocation2 + $0x2e0] sm:$0xff]
      %v1584 = vld [vmem:[#allocation2 + $0x2e8] sm:$0xff]
      %v1585 = vld [vmem:[#allocation2 + $0x2f0] sm:$0xff]
      %v1586 = vld [vmem:[#allocation2 + $0x2f8] sm:$0xff]
      %v1587 = vld [vmem:[#allocation2 + $0x300] sm:$0xff]
      %v1588 = vld [vmem:[#allocation2 + $0x308] sm:$0xff]
      %v1589 = vld [vmem:[#allocation2 + $0x310] sm:$0xff]
      %v1590 = vld [vmem:[#allocation2 + $0x318] sm:$0xff]
      %v1591 = vld [vmem:[#allocation2 + $0x320] sm:$0xff]
      %v1592 = vld [vmem:[#allocation2 + $0x328] sm:$0xff]
      %v1593 = vld [vmem:[#allocation2 + $0x330] sm:$0xff]
      %v1594 = vld [vmem:[#allocation2 + $0x338] sm:$0xff]
      %v1595 = vld [vmem:[#allocation2 + $0x340] sm:$0xff]
      %v1596 = vld [vmem:[#allocation2 + $0x348] sm:$0xff]
      %v1597 = vld [vmem:[#allocation2 + $0x350] sm:$0xff]
      %v1598 = vld [vmem:[#allocation2 + $0x358] sm:$0xff]
      %v1599 = vld [vmem:[#allocation2 + $0x360] sm:$0xff]
      %v1600 = vld [vmem:[#allocation2 + $0x368] sm:$0xff]
      %v1601 = vld [vmem:[#allocation2 + $0x370] sm:$0xff]
      %v1602 = vld [vmem:[#allocation2 + $0x378] sm:$0xff]
      %v1603 = vld [vmem:[#allocation2 + $0x380] sm:$0xff]
      %v1604 = vld [vmem:[#allocation2 + $0x388] sm:$0xff]
      %v1605 = vld [vmem:[#allocation2 + $0x390] sm:$0xff]
      %v1606 = vld [vmem:[#allocation2 + $0x398] sm:$0xff]
      %v1607 = vld [vmem:[#allocation2 + $0x3a0] sm:$0xff]
      %v1608 = vld [vmem:[#allocation2 + $0x3a8] sm:$0xff]
      %v1609 = vld [vmem:[#allocation2 + $0x3b0] sm:$0xff]
      %v1610 = vld [vmem:[#allocation2 + $0x3b8] sm:$0xff]
      %v1611 = vld [vmem:[#allocation2 + $0x3c0] sm:$0xff]
      %v1612 = vld [vmem:[#allocation2 + $0x3c8] sm:$0xff]
      %v1613 = vld [vmem:[#allocation2 + $0x3d0] sm:$0xff]
      %v1614 = vld [vmem:[#allocation2 + $0x3d8] sm:$0xff]
      %v1615 = vld [vmem:[#allocation2 + $0x3e0] sm:$0xff]
      %v1616 = vld [vmem:[#allocation2 + $0x3e8] sm:$0xff]
      %v1617 = vld [vmem:[#allocation2 + $0x3f0] sm:$0xff]
      %v1618 = vld [vmem:[#allocation2 + $0x3f8] sm:$0xff]
      %v1619 = vld [vmem:[%s2] sm:$0x3]
      %v1621 = vlaneseq
      %v1622 = vshrl.u32 %v1621, 7
      %v1623 = vsub.s32 0, %v1622
      %v1624 = vrot.slane %v1619, %v1623
      %v1625 = vlaneseq
      %v1626 = vshrl.u32 %v1625, 7
      %v1627 = vsub.s32 1, %v1626
      %v1628 = vrot.slane %v1619, %v1627
      %v1631 = vadd.f32 %v1491, %v1624
      %v1632 = vadd.f32 %v1492, %v1628
      %v1633 = vadd.f32 %v1493, %v1624
      %v1634 = vadd.f32 %v1494, %v1628
      %v1635 = vadd.f32 %v1495, %v1624
      %v1636 = vadd.f32 %v1496, %v1628
      %v1637 = vadd.f32 %v1497, %v1624
      %v1638 = vadd.f32 %v1498, %v1628
      %v1639 = vadd.f32 %v1499, %v1624
      %v1640 = vadd.f32 %v1500, %v1628
      %v1641 = vadd.f32 %v1501, %v1624
      %v1642 = vadd.f32 %v1502, %v1628
      %v1643 = vadd.f32 %v1503, %v1624
      %v1644 = vadd.f32 %v1504, %v1628
      %v1645 = vadd.f32 %v1505, %v1624
      %v1646 = vadd.f32 %v1506, %v1628
      %v1647 = vadd.f32 %v1507, %v1624
      %v1648 = vadd.f32 %v1508, %v1628
      %v1649 = vadd.f32 %v1509, %v1624
      %v1650 = vadd.f32 %v1510, %v1628
      %v1651 = vadd.f32 %v1511, %v1624
      %v1652 = vadd.f32 %v1512, %v1628
      %v1653 = vadd.f32 %v1513, %v1624
      %v1654 = vadd.f32 %v1514, %v1628
      %v1655 = vadd.f32 %v1515, %v1624
      %v1656 = vadd.f32 %v1516, %v1628
      %v1657 = vadd.f32 %v1517, %v1624
      %v1658 = vadd.f32 %v1518, %v1628
      %v1659 = vadd.f32 %v1519, %v1624
      %v1660 = vadd.f32 %v1520, %v1628
      %v1661 = vadd.f32 %v1521, %v1624
      %v1662 = vadd.f32 %v1522, %v1628
      %v1663 = vadd.f32 %v1523, %v1624
      %v1664 = vadd.f32 %v1524, %v1628
      %v1665 = vadd.f32 %v1525, %v1624
      %v1666 = vadd.f32 %v1526, %v1628
      %v1667 = vadd.f32 %v1527, %v1624
      %v1668 = vadd.f32 %v1528, %v1628
      %v1669 = vadd.f32 %v1529, %v1624
      %v1670 = vadd.f32 %v1530, %v1628
      %v1671 = vadd.f32 %v1531, %v1624
      %v1672 = vadd.f32 %v1532, %v1628
      %v1673 = vadd.f32 %v1533, %v1624
      %v1674 = vadd.f32 %v1534, %v1628
      %v1675 = vadd.f32 %v1535, %v1624
      %v1676 = vadd.f32 %v1536, %v1628
      %v1677 = vadd.f32 %v1537, %v1624
      %v1678 = vadd.f32 %v1538, %v1628
      %v1679 = vadd.f32 %v1539, %v1624
      %v1680 = vadd.f32 %v1540, %v1628
      %v1681 = vadd.f32 %v1541, %v1624
      %v1682 = vadd.f32 %v1542, %v1628
      %v1683 = vadd.f32 %v1543, %v1624
      %v1684 = vadd.f32 %v1544, %v1628
      %v1685 = vadd.f32 %v1545, %v1624
      %v1686 = vadd.f32 %v1546, %v1628
      %v1687 = vadd.f32 %v1547, %v1624
      %v1688 = vadd.f32 %v1548, %v1628
      %v1689 = vadd.f32 %v1549, %v1624
      %v1690 = vadd.f32 %v1550, %v1628
      %v1691 = vadd.f32 %v1551, %v1624
      %v1692 = vadd.f32 %v1552, %v1628
      %v1693 = vadd.f32 %v1553, %v1624
      %v1694 = vadd.f32 %v1554, %v1628
      %v1695 = vadd.f32 %v1555, %v1624
      %v1696 = vadd.f32 %v1556, %v1628
      %v1697 = vadd.f32 %v1557, %v1624
      %v1698 = vadd.f32 %v1558, %v1628
      %v1699 = vadd.f32 %v1559, %v1624
      %v1700 = vadd.f32 %v1560, %v1628
      %v1701 = vadd.f32 %v1561, %v1624
      %v1702 = vadd.f32 %v1562, %v1628
      %v1703 = vadd.f32 %v1563, %v1624
      %v1704 = vadd.f32 %v1564, %v1628
      %v1705 = vadd.f32 %v1565, %v1624
      %v1706 = vadd.f32 %v1566, %v1628
      %v1707 = vadd.f32 %v1567, %v1624
      %v1708 = vadd.f32 %v1568, %v1628
      %v1709 = vadd.f32 %v1569, %v1624
      %v1710 = vadd.f32 %v1570, %v1628
      %v1711 = vadd.f32 %v1571, %v1624
      %v1712 = vadd.f32 %v1572, %v1628
      %v1713 = vadd.f32 %v1573, %v1624
      %v1714 = vadd.f32 %v1574, %v1628
      %v1715 = vadd.f32 %v1575, %v1624
      %v1716 = vadd.f32 %v1576, %v1628
      %v1717 = vadd.f32 %v1577, %v1624
      %v1718 = vadd.f32 %v1578, %v1628
      %v1719 = vadd.f32 %v1579, %v1624
      %v1720 = vadd.f32 %v1580, %v1628
      %v1721 = vadd.f32 %v1581, %v1624
      %v1722 = vadd.f32 %v1582, %v1628
      %v1723 = vadd.f32 %v1583, %v1624
      %v1724 = vadd.f32 %v1584, %v1628
      %v1725 = vadd.f32 %v1585, %v1624
      %v1726 = vadd.f32 %v1586, %v1628
      %v1727 = vadd.f32 %v1587, %v1624
      %v1728 = vadd.f32 %v1588, %v1628
      %v1729 = vadd.f32 %v1589, %v1624
      %v1730 = vadd.f32 %v1590, %v1628
      %v1731 = vadd.f32 %v1591, %v1624
      %v1732 = vadd.f32 %v1592, %v1628
      %v1733 = vadd.f32 %v1593, %v1624
      %v1734 = vadd.f32 %v1594, %v1628
      %v1735 = vadd.f32 %v1595, %v1624
      %v1736 = vadd.f32 %v1596, %v1628
      %v1737 = vadd.f32 %v1597, %v1624
      %v1738 = vadd.f32 %v1598, %v1628
      %v1739 = vadd.f32 %v1599, %v1624
      %v1740 = vadd.f32 %v1600, %v1628
      %v1741 = vadd.f32 %v1601, %v1624
      %v1742 = vadd.f32 %v1602, %v1628
      %v1743 = vadd.f32 %v1603, %v1624
      %v1744 = vadd.f32 %v1604, %v1628
      %v1745 = vadd.f32 %v1605, %v1624
      %v1746 = vadd.f32 %v1606, %v1628
      %v1747 = vadd.f32 %v1607, %v1624
      %v1748 = vadd.f32 %v1608, %v1628
      %v1749 = vadd.f32 %v1609, %v1624
      %v1750 = vadd.f32 %v1610, %v1628
      %v1751 = vadd.f32 %v1611, %v1624
      %v1752 = vadd.f32 %v1612, %v1628
      %v1753 = vadd.f32 %v1613, %v1624
      %v1754 = vadd.f32 %v1614, %v1628
      %v1755 = vadd.f32 %v1615, %v1624
      %v1756 = vadd.f32 %v1616, %v1628
      %v1757 = vadd.f32 %v1617, %v1624
      %v1758 = vadd.f32 %v1618, %v1628
      %v1759 = vpack.c.bf16 %v1633, %v1631
      %v1760 = vpack.c.bf16 %v1634, %v1632
      %v1761 = vpack.c.bf16 %v1637, %v1635
      %v1762 = vpack.c.bf16 %v1638, %v1636
      %v1763 = vpack.c.bf16 %v1641, %v1639
      %v1764 = vpack.c.bf16 %v1642, %v1640
      %v1765 = vpack.c.bf16 %v1645, %v1643
      %v1766 = vpack.c.bf16 %v1646, %v1644
      %v1767 = vpack.c.bf16 %v1649, %v1647
      %v1768 = vpack.c.bf16 %v1650, %v1648
      %v1769 = vpack.c.bf16 %v1653, %v1651
      %v1770 = vpack.c.bf16 %v1654, %v1652
      %v1771 = vpack.c.bf16 %v1657, %v1655
      %v1772 = vpack.c.bf16 %v1658, %v1656
      %v1773 = vpack.c.bf16 %v1661, %v1659
      %v1774 = vpack.c.bf16 %v1662, %v1660
      %v1775 = vpack.c.bf16 %v1665, %v1663
      %v1776 = vpack.c.bf16 %v1666, %v1664
      %v1777 = vpack.c.bf16 %v1669, %v1667
      %v1778 = vpack.c.bf16 %v1670, %v1668
      %v1779 = vpack.c.bf16 %v1673, %v1671
      %v1780 = vpack.c.bf16 %v1674, %v1672
      %v1781 = vpack.c.bf16 %v1677, %v1675
      %v1782 = vpack.c.bf16 %v1678, %v1676
      %v1783 = vpack.c.bf16 %v1681, %v1679
      %v1784 = vpack.c.bf16 %v1682, %v1680
      %v1785 = vpack.c.bf16 %v1685, %v1683
      %v1786 = vpack.c.bf16 %v1686, %v1684
      %v1787 = vpack.c.bf16 %v1689, %v1687
      %v1788 = vpack.c.bf16 %v1690, %v1688
      %v1789 = vpack.c.bf16 %v1693, %v1691
      %v1790 = vpack.c.bf16 %v1694, %v1692
      %v1791 = vpack.c.bf16 %v1697, %v1695
      %v1792 = vpack.c.bf16 %v1698, %v1696
      %v1793 = vpack.c.bf16 %v1701, %v1699
      %v1794 = vpack.c.bf16 %v1702, %v1700
      %v1795 = vpack.c.bf16 %v1705, %v1703
      %v1796 = vpack.c.bf16 %v1706, %v1704
      %v1797 = vpack.c.bf16 %v1709, %v1707
      %v1798 = vpack.c.bf16 %v1710, %v1708
      %v1799 = vpack.c.bf16 %v1713, %v1711
      %v1800 = vpack.c.bf16 %v1714, %v1712
      %v1801 = vpack.c.bf16 %v1717, %v1715
      %v1802 = vpack.c.bf16 %v1718, %v1716
      %v1803 = vpack.c.bf16 %v1721, %v1719
      %v1804 = vpack.c.bf16 %v1722, %v1720
      %v1805 = vpack.c.bf16 %v1725, %v1723
      %v1806 = vpack.c.bf16 %v1726, %v1724
      %v1807 = vpack.c.bf16 %v1729, %v1727
      %v1808 = vpack.c.bf16 %v1730, %v1728
      %v1809 = vpack.c.bf16 %v1733, %v1731
      %v1810 = vpack.c.bf16 %v1734, %v1732
      %v1811 = vpack.c.bf16 %v1737, %v1735
      %v1812 = vpack.c.bf16 %v1738, %v1736
      %v1813 = vpack.c.bf16 %v1741, %v1739
      %v1814 = vpack.c.bf16 %v1742, %v1740
      %v1815 = vpack.c.bf16 %v1745, %v1743
      %v1816 = vpack.c.bf16 %v1746, %v1744
      %v1817 = vpack.c.bf16 %v1749, %v1747
      %v1818 = vpack.c.bf16 %v1750, %v1748
      %v1819 = vpack.c.bf16 %v1753, %v1751
      %v1820 = vpack.c.bf16 %v1754, %v1752
      %v1821 = vpack.c.bf16 %v1757, %v1755
      %v1822 = vpack.c.bf16 %v1758, %v1756
      %v1887 = vunpack.c.l.b16 %v1759
      %v1888 = vunpack.c.l.b16 %v1760
      %v1889 = vunpack.c.h.b16 %v1759
      %v1890 = vunpack.c.h.b16 %v1760
      %v1891 = vunpack.c.l.b16 %v1761
      %v1892 = vunpack.c.l.b16 %v1762
      %v1893 = vunpack.c.h.b16 %v1761
      %v1894 = vunpack.c.h.b16 %v1762
      %v1895 = vunpack.c.l.b16 %v1763
      %v1896 = vunpack.c.l.b16 %v1764
      %v1897 = vunpack.c.h.b16 %v1763
      %v1898 = vunpack.c.h.b16 %v1764
      %v1899 = vunpack.c.l.b16 %v1765
      %v1900 = vunpack.c.l.b16 %v1766
      %v1901 = vunpack.c.h.b16 %v1765
      %v1902 = vunpack.c.h.b16 %v1766
      %v1903 = vunpack.c.l.b16 %v1767
      %v1904 = vunpack.c.l.b16 %v1768
      %v1905 = vunpack.c.h.b16 %v1767
      %v1906 = vunpack.c.h.b16 %v1768
      %v1907 = vunpack.c.l.b16 %v1769
      %v1908 = vunpack.c.l.b16 %v1770
      %v1909 = vunpack.c.h.b16 %v1769
      %v1910 = vunpack.c.h.b16 %v1770
      %v1911 = vunpack.c.l.b16 %v1771
      %v1912 = vunpack.c.l.b16 %v1772
      %v1913 = vunpack.c.h.b16 %v1771
      %v1914 = vunpack.c.h.b16 %v1772
      %v1915 = vunpack.c.l.b16 %v1773
      %v1916 = vunpack.c.l.b16 %v1774
      %v1917 = vunpack.c.h.b16 %v1773
      %v1918 = vunpack.c.h.b16 %v1774
      %v1919 = vunpack.c.l.b16 %v1775
      %v1920 = vunpack.c.l.b16 %v1776
      %v1921 = vunpack.c.h.b16 %v1775
      %v1922 = vunpack.c.h.b16 %v1776
      %v1923 = vunpack.c.l.b16 %v1777
      %v1924 = vunpack.c.l.b16 %v1778
      %v1925 = vunpack.c.h.b16 %v1777
      %v1926 = vunpack.c.h.b16 %v1778
      %v1927 = vunpack.c.l.b16 %v1779
      %v1928 = vunpack.c.l.b16 %v1780
      %v1929 = vunpack.c.h.b16 %v1779
      %v1930 = vunpack.c.h.b16 %v1780
      %v1931 = vunpack.c.l.b16 %v1781
      %v1932 = vunpack.c.l.b16 %v1782
      %v1933 = vunpack.c.h.b16 %v1781
      %v1934 = vunpack.c.h.b16 %v1782
      %v1935 = vunpack.c.l.b16 %v1783
      %v1936 = vunpack.c.l.b16 %v1784
      %v1937 = vunpack.c.h.b16 %v1783
      %v1938 = vunpack.c.h.b16 %v1784
      %v1939 = vunpack.c.l.b16 %v1785
      %v1940 = vunpack.c.l.b16 %v1786
      %v1941 = vunpack.c.h.b16 %v1785
      %v1942 = vunpack.c.h.b16 %v1786
      %v1943 = vunpack.c.l.b16 %v1787
      %v1944 = vunpack.c.l.b16 %v1788
      %v1945 = vunpack.c.h.b16 %v1787
      %v1946 = vunpack.c.h.b16 %v1788
      %v1947 = vunpack.c.l.b16 %v1789
      %v1948 = vunpack.c.l.b16 %v1790
      %v1949 = vunpack.c.h.b16 %v1789
      %v1950 = vunpack.c.h.b16 %v1790
      %v1951 = vunpack.c.l.b16 %v1791
      %v1952 = vunpack.c.l.b16 %v1792
      %v1953 = vunpack.c.h.b16 %v1791
      %v1954 = vunpack.c.h.b16 %v1792
      %v1955 = vunpack.c.l.b16 %v1793
      %v1956 = vunpack.c.l.b16 %v1794
      %v1957 = vunpack.c.h.b16 %v1793
      %v1958 = vunpack.c.h.b16 %v1794
      %v1959 = vunpack.c.l.b16 %v1795
      %v1960 = vunpack.c.l.b16 %v1796
      %v1961 = vunpack.c.h.b16 %v1795
      %v1962 = vunpack.c.h.b16 %v1796
      %v1963 = vunpack.c.l.b16 %v1797
      %v1964 = vunpack.c.l.b16 %v1798
      %v1965 = vunpack.c.h.b16 %v1797
      %v1966 = vunpack.c.h.b16 %v1798
      %v1967 = vunpack.c.l.b16 %v1799
      %v1968 = vunpack.c.l.b16 %v1800
      %v1969 = vunpack.c.h.b16 %v1799
      %v1970 = vunpack.c.h.b16 %v1800
      %v1971 = vunpack.c.l.b16 %v1801
      %v1972 = vunpack.c.l.b16 %v1802
      %v1973 = vunpack.c.h.b16 %v1801
      %v1974 = vunpack.c.h.b16 %v1802
      %v1975 = vunpack.c.l.b16 %v1803
      %v1976 = vunpack.c.l.b16 %v1804
      %v1977 = vunpack.c.h.b16 %v1803
      %v1978 = vunpack.c.h.b16 %v1804
      %v1979 = vunpack.c.l.b16 %v1805
      %v1980 = vunpack.c.l.b16 %v1806
      %v1981 = vunpack.c.h.b16 %v1805
      %v1982 = vunpack.c.h.b16 %v1806
      %v1983 = vunpack.c.l.b16 %v1807
      %v1984 = vunpack.c.l.b16 %v1808
      %v1985 = vunpack.c.h.b16 %v1807
      %v1986 = vunpack.c.h.b16 %v1808
      %v1987 = vunpack.c.l.b16 %v1809
      %v1988 = vunpack.c.l.b16 %v1810
      %v1989 = vunpack.c.h.b16 %v1809
      %v1990 = vunpack.c.h.b16 %v1810
      %v1991 = vunpack.c.l.b16 %v1811
      %v1992 = vunpack.c.l.b16 %v1812
      %v1993 = vunpack.c.h.b16 %v1811
      %v1994 = vunpack.c.h.b16 %v1812
      %v1995 = vunpack.c.l.b16 %v1813
      %v1996 = vunpack.c.l.b16 %v1814
      %v1997 = vunpack.c.h.b16 %v1813
      %v1998 = vunpack.c.h.b16 %v1814
      %v1999 = vunpack.c.l.b16 %v1815
      %v2000 = vunpack.c.l.b16 %v1816
      %v2001 = vunpack.c.h.b16 %v1815
      %v2002 = vunpack.c.h.b16 %v1816
      %v2003 = vunpack.c.l.b16 %v1817
      %v2004 = vunpack.c.l.b16 %v1818
      %v2005 = vunpack.c.h.b16 %v1817
      %v2006 = vunpack.c.h.b16 %v1818
      %v2007 = vunpack.c.l.b16 %v1819
      %v2008 = vunpack.c.l.b16 %v1820
      %v2009 = vunpack.c.h.b16 %v1819
      %v2010 = vunpack.c.h.b16 %v1820
      %v2011 = vunpack.c.l.b16 %v1821
      %v2012 = vunpack.c.l.b16 %v1822
      %v2013 = vunpack.c.h.b16 %v1821
      %v2014 = vunpack.c.h.b16 %v1822
      %v2015 = vpack.c.b16 %v1888, %v1887
      %v2016 = vpack.c.b16 %v1890, %v1889
      %v2017 = vpack.c.b16 %v1892, %v1891
      %v2018 = vpack.c.b16 %v1894, %v1893
      %v2019 = vpack.c.b16 %v1896, %v1895
      %v2020 = vpack.c.b16 %v1898, %v1897
      %v2021 = vpack.c.b16 %v1900, %v1899
      %v2022 = vpack.c.b16 %v1902, %v1901
      %v2023 = vpack.c.b16 %v1904, %v1903
      %v2024 = vpack.c.b16 %v1906, %v1905
      %v2025 = vpack.c.b16 %v1908, %v1907
      %v2026 = vpack.c.b16 %v1910, %v1909
      %v2027 = vpack.c.b16 %v1912, %v1911
      %v2028 = vpack.c.b16 %v1914, %v1913
      %v2029 = vpack.c.b16 %v1916, %v1915
      %v2030 = vpack.c.b16 %v1918, %v1917
      %v2031 = vpack.c.b16 %v1920, %v1919
      %v2032 = vpack.c.b16 %v1922, %v1921
      %v2033 = vpack.c.b16 %v1924, %v1923
      %v2034 = vpack.c.b16 %v1926, %v1925
      %v2035 = vpack.c.b16 %v1928, %v1927
      %v2036 = vpack.c.b16 %v1930, %v1929
      %v2037 = vpack.c.b16 %v1932, %v1931
      %v2038 = vpack.c.b16 %v1934, %v1933
      %v2039 = vpack.c.b16 %v1936, %v1935
      %v2040 = vpack.c.b16 %v1938, %v1937
      %v2041 = vpack.c.b16 %v1940, %v1939
      %v2042 = vpack.c.b16 %v1942, %v1941
      %v2043 = vpack.c.b16 %v1944, %v1943
      %v2044 = vpack.c.b16 %v1946, %v1945
      %v2045 = vpack.c.b16 %v1948, %v1947
      %v2046 = vpack.c.b16 %v1950, %v1949
      %v2047 = vpack.c.b16 %v1952, %v1951
      %v2048 = vpack.c.b16 %v1954, %v1953
      %v2049 = vpack.c.b16 %v1956, %v1955
      %v2050 = vpack.c.b16 %v1958, %v1957
      %v2051 = vpack.c.b16 %v1960, %v1959
      %v2052 = vpack.c.b16 %v1962, %v1961
      %v2053 = vpack.c.b16 %v1964, %v1963
      %v2054 = vpack.c.b16 %v1966, %v1965
      %v2055 = vpack.c.b16 %v1968, %v1967
      %v2056 = vpack.c.b16 %v1970, %v1969
      %v2057 = vpack.c.b16 %v1972, %v1971
      %v2058 = vpack.c.b16 %v1974, %v1973
      %v2059 = vpack.c.b16 %v1976, %v1975
      %v2060 = vpack.c.b16 %v1978, %v1977
      %v2061 = vpack.c.b16 %v1980, %v1979
      %v2062 = vpack.c.b16 %v1982, %v1981
      %v2063 = vpack.c.b16 %v1984, %v1983
      %v2064 = vpack.c.b16 %v1986, %v1985
      %v2065 = vpack.c.b16 %v1988, %v1987
      %v2066 = vpack.c.b16 %v1990, %v1989
      %v2067 = vpack.c.b16 %v1992, %v1991
      %v2068 = vpack.c.b16 %v1994, %v1993
      %v2069 = vpack.c.b16 %v1996, %v1995
      %v2070 = vpack.c.b16 %v1998, %v1997
      %v2071 = vpack.c.b16 %v2000, %v1999
      %v2072 = vpack.c.b16 %v2002, %v2001
      %v2073 = vpack.c.b16 %v2004, %v2003
      %v2074 = vpack.c.b16 %v2006, %v2005
      %v2075 = vpack.c.b16 %v2008, %v2007
      %v2076 = vpack.c.b16 %v2010, %v2009
      %v2077 = vpack.c.b16 %v2012, %v2011
      %v2078 = vpack.c.b16 %v2014, %v2013
      %2143 = vst [vmem:[#allocation8] sm:$0xff] %v2015
      %2144 = vst [vmem:[#allocation8 + $0x8] sm:$0xff] %v2016
      %2145 = vst [vmem:[#allocation8 + $0x10] sm:$0xff] %v2017
      %2146 = vst [vmem:[#allocation8 + $0x18] sm:$0xff] %v2018
      %2147 = vst [vmem:[#allocation8 + $0x20] sm:$0xff] %v2019
      %2148 = vst [vmem:[#allocation8 + $0x28] sm:$0xff] %v2020
      %2149 = vst [vmem:[#allocation8 + $0x30] sm:$0xff] %v2021
      %2150 = vst [vmem:[#allocation8 + $0x38] sm:$0xff] %v2022
      %2151 = vst [vmem:[#allocation8 + $0x40] sm:$0xff] %v2023
      %2152 = vst [vmem:[#allocation8 + $0x48] sm:$0xff] %v2024
      %2153 = vst [vmem:[#allocation8 + $0x50] sm:$0xff] %v2025
      %2154 = vst [vmem:[#allocation8 + $0x58] sm:$0xff] %v2026
      %2155 = vst [vmem:[#allocation8 + $0x60] sm:$0xff] %v2027
      %2156 = vst [vmem:[#allocation8 + $0x68] sm:$0xff] %v2028
      %2157 = vst [vmem:[#allocation8 + $0x70] sm:$0xff] %v2029
      %2158 = vst [vmem:[#allocation8 + $0x78] sm:$0xff] %v2030
      %2159 = vst [vmem:[#allocation8 + $0x80] sm:$0xff] %v2031
      %2160 = vst [vmem:[#allocation8 + $0x88] sm:$0xff] %v2032
      %2161 = vst [vmem:[#allocation8 + $0x90] sm:$0xff] %v2033
      %2162 = vst [vmem:[#allocation8 + $0x98] sm:$0xff] %v2034
      %2163 = vst [vmem:[#allocation8 + $0xa0] sm:$0xff] %v2035
      %2164 = vst [vmem:[#allocation8 + $0xa8] sm:$0xff] %v2036
      %2165 = vst [vmem:[#allocation8 + $0xb0] sm:$0xff] %v2037
      %2166 = vst [vmem:[#allocation8 + $0xb8] sm:$0xff] %v2038
      %2167 = vst [vmem:[#allocation8 + $0xc0] sm:$0xff] %v2039
      %2168 = vst [vmem:[#allocation8 + $0xc8] sm:$0xff] %v2040
      %2169 = vst [vmem:[#allocation8 + $0xd0] sm:$0xff] %v2041
      %2170 = vst [vmem:[#allocation8 + $0xd8] sm:$0xff] %v2042
      %2171 = vst [vmem:[#allocation8 + $0xe0] sm:$0xff] %v2043
      %2172 = vst [vmem:[#allocation8 + $0xe8] sm:$0xff] %v2044
      %2173 = vst [vmem:[#allocation8 + $0xf0] sm:$0xff] %v2045
      %2174 = vst [vmem:[#allocation8 + $0xf8] sm:$0xff] %v2046
      %2175 = vst [vmem:[#allocation8 + $0x100] sm:$0xff] %v2047
      %2176 = vst [vmem:[#allocation8 + $0x108] sm:$0xff] %v2048
      %2177 = vst [vmem:[#allocation8 + $0x110] sm:$0xff] %v2049
      %2178 = vst [vmem:[#allocation8 + $0x118] sm:$0xff] %v2050
      %2179 = vst [vmem:[#allocation8 + $0x120] sm:$0xff] %v2051
      %2180 = vst [vmem:[#allocation8 + $0x128] sm:$0xff] %v2052
      %2181 = vst [vmem:[#allocation8 + $0x130] sm:$0xff] %v2053
      %2182 = vst [vmem:[#allocation8 + $0x138] sm:$0xff] %v2054
      %2183 = vst [vmem:[#allocation8 + $0x140] sm:$0xff] %v2055
      %2184 = vst [vmem:[#allocation8 + $0x148] sm:$0xff] %v2056
      %2185 = vst [vmem:[#allocation8 + $0x150] sm:$0xff] %v2057
      %2186 = vst [vmem:[#allocation8 + $0x158] sm:$0xff] %v2058
      %2187 = vst [vmem:[#allocation8 + $0x160] sm:$0xff] %v2059
      %2188 = vst [vmem:[#allocation8 + $0x168] sm:$0xff] %v2060
      %2189 = vst [vmem:[#allocation8 + $0x170] sm:$0xff] %v2061
      %2190 = vst [vmem:[#allocation8 + $0x178] sm:$0xff] %v2062
      %2191 = vst [vmem:[#allocation8 + $0x180] sm:$0xff] %v2063
      %2192 = vst [vmem:[#allocation8 + $0x188] sm:$0xff] %v2064
      %2193 = vst [vmem:[#allocation8 + $0x190] sm:$0xff] %v2065
      %2194 = vst [vmem:[#allocation8 + $0x198] sm:$0xff] %v2066
      %2195 = vst [vmem:[#allocation8 + $0x1a0] sm:$0xff] %v2067
      %2196 = vst [vmem:[#allocation8 + $0x1a8] sm:$0xff] %v2068
      %2197 = vst [vmem:[#allocation8 + $0x1b0] sm:$0xff] %v2069
      %2198 = vst [vmem:[#allocation8 + $0x1b8] sm:$0xff] %v2070
      %2199 = vst [vmem:[#allocation8 + $0x1c0] sm:$0xff] %v2071
      %2200 = vst [vmem:[#allocation8 + $0x1c8] sm:$0xff] %v2072
      %2201 = vst [vmem:[#allocation8 + $0x1d0] sm:$0xff] %v2073
      %2202 = vst [vmem:[#allocation8 + $0x1d8] sm:$0xff] %v2074
      %2203 = vst [vmem:[#allocation8 + $0x1e0] sm:$0xff] %v2075
      %2204 = vst [vmem:[#allocation8 + $0x1e8] sm:$0xff] %v2076
      %2205 = vst [vmem:[#allocation8 + $0x1f0] sm:$0xff] %v2077
      %2206 = vst [vmem:[#allocation8 + $0x1f8] sm:$0xff] %v2078
    $region29: #{tpu_custom_call.1} parent=1 // pred_fallthru
      _
    // Predicated region
    $region30: #{tpu_custom_call.1} parent=1 // pred_check
      _
    $region31: #{tpu_custom_call.1} parent=1 // pred_check_branch
      %2208 = sbr.rel (0) target = $region33
    $region32: #{tpu_custom_call.1} parent=1 // pred_region
      %s2210 = ssub.s32 8192, 8192
      %2211 = vsyncadd [#allocation5], %s2210
      %s2212 = sshll.u32 [#allocation8], 4
      %s2213 = int_to_ptr.vmem [resolvable:$true] %s2212
      %2218 = dma.vmem_to_hbm [thread:$0]  %s2213, 8192, %s3, [#allocation5], 128, 128, 8
    $region33: #{tpu_custom_call.1} parent=1 // pred_fallthru
      _
    // Predicated region
    $region34: #{tpu_custom_call.1} parent=1 // pred_check
      _
    $region35: #{tpu_custom_call.1} parent=1 // pred_check_branch
      %2220 = sbr.rel (0) target = $region37
    $region36: #{tpu_custom_call.1} parent=1 // pred_region
      %2221 = dma.done [#allocation5], 8192
    $region37: #{tpu_custom_call.1} parent=1 // pred_fallthru
      _
    %2222 = vsyncpa [#allocation4], 1
    %2223 = vsyncpa [#allocation7], 1
    %2224 = vsyncpa [#allocation5], 1

</llo_original>
